<compile_context>
chip_gen: v6e
topology: v6e:2x2x1
jax: 0.10.0
libtpu: 0.0.40
codegen_flags: <defaults>
</compile_context>

<pallas_src>
import math

import jax
import jax.numpy as jnp
from jax import lax
from jax.experimental import pallas as pl
from jax.experimental.pallas import tpu as pltpu


# ----------------------------------------------------------------------------
# Kernels
# ----------------------------------------------------------------------------

def _q_proj_kernel(x_ref, w_ref, b_ref, o_ref):
    # x: (1, ts, E) bf16, w: (E, H) bf16 (scale folded in), b: (1, H) f32.
    o_ref[0] = (
        jnp.dot(x_ref[0], w_ref[...], preferred_element_type=jnp.float32)
        + b_ref[...]
    ).astype(o_ref.dtype)


def _kv_proj_kernel(k_ref, v_ref, wk_ref, bk_ref, wv_ref, bv_ref,
                    ko_ref, vo_ref):
    ko_ref[0] = (
        jnp.dot(k_ref[0], wk_ref[...], preferred_element_type=jnp.float32)
        + bk_ref[...]
    ).astype(ko_ref.dtype)
    vo_ref[0] = (
        jnp.dot(v_ref[0], wv_ref[...], preferred_element_type=jnp.float32)
        + bv_ref[...]
    ).astype(vo_ref.dtype)


def _flash_kernel(q_ref, k_ref, v_ref, o_ref, m_scr, l_scr, acc_scr):
    ki = pl.program_id(2)

    @pl.when(ki == 0)
    def _():
        m_scr[...] = jnp.full(m_scr.shape, -jnp.inf, m_scr.dtype)
        l_scr[...] = jnp.zeros(l_scr.shape, l_scr.dtype)
        acc_scr[...] = jnp.zeros(acc_scr.shape, acc_scr.dtype)

    q = q_ref[0]  # (tq, H) bf16, already scaled by 1/sqrt(d_k)
    k = k_ref[0]  # (tk, H) bf16
    v = v_ref[0]  # (tk, H) bf16

    # scores = q @ k^T as a direct contraction over the last dims (no XLU
    # transpose), f32 accumulation on the MXU.
    s = lax.dot_general(
        q, k,
        dimension_numbers=(((1,), (1,)), ((), ())),
        preferred_element_type=jnp.float32,
    )

    # Online-softmax update (f32 on VPU/EUP; safe on v5e too).
    m_prev = m_scr[...]
    m_new = jnp.maximum(m_prev, jnp.max(s, axis=-1, keepdims=True))
    alpha = jnp.exp(m_prev - m_new)
    p = jnp.exp(s - m_new)
    l_scr[...] = alpha * l_scr[...] + jnp.sum(p, axis=-1, keepdims=True)
    acc_scr[...] = alpha * acc_scr[...] + jnp.dot(
        p.astype(jnp.bfloat16), v, preferred_element_type=jnp.float32
    )
    m_scr[...] = m_new

    @pl.when(ki == pl.num_programs(2) - 1)
    def _():
        # Runs once per q-tile -> exact reciprocal is free accuracy.
        inv_l = pl.reciprocal(l_scr[...], approx=False)
        o_ref[0] = (acc_scr[...] * inv_l).astype(o_ref.dtype)


# ----------------------------------------------------------------------------
# Host-side helpers
# ----------------------------------------------------------------------------

def _pick_tile(s, cap):
    """Largest tile <= cap dividing s that is s itself or a multiple of 8."""
    if s <= cap:
        return s
    for t in range(cap, 7, -1):
        if s % t == 0 and t % 8 == 0:
            return t
    return s  # fall back to the full (untilable) sequence


def _vmem_limit_bytes():
    """Generation-aware VMEM limit (v7x has 64 MiB physical, v5e/v6e 128)."""
    try:
        cap = int(pltpu.get_tpu_info().vmem_capacity_bytes)
    except Exception:  # pragma: no cover - conservative fallback
        cap = 64 * 1024 * 1024
    return min((cap * 3) // 4, 96 * 1024 * 1024)


def _project_q(x_b, w_b, b_f, ts, vmem_limit):
    B, S, E = x_b.shape
    H = w_b.shape[1]
    return pl.pallas_call(
        _q_proj_kernel,
        out_shape=jax.ShapeDtypeStruct((B, S, H), jnp.bfloat16),
        grid_spec=pltpu.PrefetchScalarGridSpec(
            num_scalar_prefetch=0,
            grid=(B, S // ts),
            in_specs=[
                pl.BlockSpec((1, ts, E), lambda b, si: (b, si, 0)),
                pl.BlockSpec((E, H), lambda b, si: (0, 0)),
                pl.BlockSpec((1, H), lambda b, si: (0, 0)),
            ],
            out_specs=pl.BlockSpec((1, ts, H), lambda b, si: (b, si, 0)),
        ),
        compiler_params=pltpu.CompilerParams(
            dimension_semantics=("parallel", "parallel"),
            vmem_limit_bytes=vmem_limit,
        ),
    )(x_b, w_b, b_f)


def _project_kv(k_b, v_b, wk_b, bk_f, wv_b, bv_f, ts, vmem_limit):
    B, S, E = k_b.shape
    H = wk_b.shape[1]
    return pl.pallas_call(
        _kv_proj_kernel,
        out_shape=(
            jax.ShapeDtypeStruct((B, S, H), jnp.bfloat16),
            jax.ShapeDtypeStruct((B, S, H), jnp.bfloat16),
        ),
        grid_spec=pltpu.PrefetchScalarGridSpec(
            num_scalar_prefetch=0,
            grid=(B, S // ts),
            in_specs=[
                pl.BlockSpec((1, ts, E), lambda b, si: (b, si, 0)),
                pl.BlockSpec((1, ts, E), lambda b, si: (b, si, 0)),
                pl.BlockSpec((E, H), lambda b, si: (0, 0)),
                pl.BlockSpec((1, H), lambda b, si: (0, 0)),
                pl.BlockSpec((E, H), lambda b, si: (0, 0)),
                pl.BlockSpec((1, H), lambda b, si: (0, 0)),
            ],
            out_specs=(
                pl.BlockSpec((1, ts, H), lambda b, si: (b, si, 0)),
                pl.BlockSpec((1, ts, H), lambda b, si: (b, si, 0)),
            ),
        ),
        compiler_params=pltpu.CompilerParams(
            dimension_semantics=("parallel", "parallel"),
            vmem_limit_bytes=vmem_limit,
        ),
    )(k_b, v_b, wk_b, bk_f, wv_b, bv_f)


@jax.jit
def attention_forward(query, key, value, wq, bq, wk, bk, wv, bv):
    """query: (B, Sq, E); key/value: (B, Skv, E); w*: (E, H); b*: (1, H)."""
    B, Sq, E = query.shape
    _, Skv, _ = key.shape
    H = wq.shape[1]

    # Fold the 1/sqrt(d_k) score scale (d_k = embed_dim per the PyTorch code)
    # into the q projection; pre-cast inputs and weights to bf16 on the host.
    scale = 1.0 / math.sqrt(E)
    wq_s = (wq * scale).astype(jnp.bfloat16)
    bq_s = (bq * scale).astype(jnp.float32)
    wk_b = wk.astype(jnp.bfloat16)
    wv_b = wv.astype(jnp.bfloat16)
    bk_f = bk.astype(jnp.float32)
    bv_f = bv.astype(jnp.float32)

    q_b = query.astype(jnp.bfloat16)
    k_b = key.astype(jnp.bfloat16)
    v_b = value.astype(jnp.bfloat16)

    vmem_limit = _vmem_limit_bytes()

    # ---- projections (once per token, outside the flash loop) -------------
    tsq = _pick_tile(Sq, 512)
    tskv = _pick_tile(Skv, 512)
    q_p = _project_q(q_b, wq_s, bq_s, tsq, vmem_limit)
    k_p, v_p = _project_kv(k_b, v_b, wk_b, bk_f, wv_b, bv_f, tskv, vmem_limit)

    # ---- flash attention ---------------------------------------------------
    tq = _pick_tile(Sq, 256)
    # Keep >= 2 parallel grid units so both v7x TensorCores get work.
    while B * (Sq // tq) < 2 and tq % 16 == 0:
        tq //= 2
    tk = _pick_tile(Skv, 256)

    grid = (B, Sq // tq, Skv // tk)

    return pl.pallas_call(
        _flash_kernel,
        out_shape=jax.ShapeDtypeStruct((B, Sq, H), query.dtype),
        grid_spec=pltpu.PrefetchScalarGridSpec(
            num_scalar_prefetch=0,
            grid=grid,
            in_specs=[
                pl.BlockSpec((1, tq, H), lambda b, qi, ki: (b, qi, 0)),
                pl.BlockSpec((1, tk, H), lambda b, qi, ki: (b, ki, 0)),
                pl.BlockSpec((1, tk, H), lambda b, qi, ki: (b, ki, 0)),
            ],
            out_specs=pl.BlockSpec((1, tq, H), lambda b, qi, ki: (b, qi, 0)),
            scratch_shapes=[
                pltpu.VMEM((tq, 1), jnp.float32),   # running max m
                pltpu.VMEM((tq, 1), jnp.float32),   # running denom l
                pltpu.VMEM((tq, H), jnp.float32),   # output accumulator
            ],
        ),
        compiler_params=pltpu.CompilerParams(
            dimension_semantics=("parallel", "parallel", "arbitrary"),
            vmem_limit_bytes=vmem_limit,
        ),
    )(q_p, k_p, v_p)


# ----------------------------------------------------------------------------
# Reference + test harness
# ----------------------------------------------------------------------------

def init_linear_params(key, in_features, out_features):
    """nn.Linear-style init (uniform +-1/sqrt(fan_in)); weight is (in, out)."""
    kw, kb = jax.random.split(key)
    bound = 1.0 / math.sqrt(in_features)
    w = jax.random.uniform(
        kw, (in_features, out_features), jnp.float32, -bound, bound
    )
    b = jax.random.uniform(kb, (1, out_features), jnp.float32, -bound, bound)
    return w, b


def reference_attention(query, key, value, wq, bq, wk, bk, wv, bv):
    d_k = query.shape[-1]
    q = query @ wq + bq
    k = key @ wk + bk
    v = value @ wv + bv
    scores = jnp.einsum("bqh,bkh->bqk", q, k) / math.sqrt(d_k)
    w = jax.nn.softmax(scores, axis=-1)
    return jnp.einsum("bqk,bkh->bqh", w, v)


if __name__ == "__main__":
    B, S, E, H = 2, 8, 32, 16  # batch, seq, embed_dim, head_dim
    root = jax.random.PRNGKey(0)
    kq, kk, kv, kpq, kpk, kpv = jax.random.split(root, 6)

    query = jax.random.normal(kq, (B, S, E), jnp.float32)
    key = jax.random.normal(kk, (B, S, E), jnp.float32)
    value = jax.random.normal(kv, (B, S, E), jnp.float32)

    wq, bq = init_linear_params(kpq, E, H)
    wk, bk = init_linear_params(kpk, E, H)
    wv, bv = init_linear_params(kpv, E, H)

    out = attention_forward(query, key, value, wq, bq, wk, bk, wv, bv)
    out = jax.block_until_ready(out)

    ref = reference_attention(query, key, value, wq, bq, wk, bk, wv, bv)
    assert out.shape == (B, S, H)
    # bf16 inputs/weights on the MXU -> looser tolerance than pure f32.
    max_err = float(jnp.max(jnp.abs(out - ref)))
    assert jnp.allclose(out, ref, atol=5e-2, rtol=5e-2), max_err

    print("KERNEL_OK")
</pallas_src>

<mosaic_0001>
module attributes {stable_mosaic.version = 11 : i64} {
  func.func @_kv_proj_kernel(%arg0: i32, %arg1: i32, %arg2: memref<1x8x32xbf16, #tpu.memory_space<vmem>>, %arg3: memref<1x8x32xbf16, #tpu.memory_space<vmem>>, %arg4: memref<32x16xbf16, #tpu.memory_space<vmem>>, %arg5: memref<1x16xf32, #tpu.memory_space<vmem>>, %arg6: memref<32x16xbf16, #tpu.memory_space<vmem>>, %arg7: memref<1x16xf32, #tpu.memory_space<vmem>>, %arg8: memref<1x8x16xbf16, #tpu.memory_space<vmem>>, %arg9: memref<1x8x16xbf16, #tpu.memory_space<vmem>>) attributes {dimension_semantics = [#tpu.dimension_semantics<parallel>, #tpu.dimension_semantics<parallel>], iteration_bounds = array<i64: 2, 1>, scalar_prefetch = 0 : i64, scratch_operands = 0 : i64, tpu.core_type = #tpu.core_type<tc>, window_params = [{transform_indices = @transform_0, window_bounds = array<i64: 1, 8, 32>}, {transform_indices = @transform_1, window_bounds = array<i64: 1, 8, 32>}, {pipeline_mode = #tpu.pipeline_mode<synchronous>, transform_indices = @transform_2, window_bounds = array<i64: 32, 16>}, {pipeline_mode = #tpu.pipeline_mode<synchronous>, transform_indices = @transform_3, window_bounds = array<i64: 1, 16>}, {pipeline_mode = #tpu.pipeline_mode<synchronous>, transform_indices = @transform_4, window_bounds = array<i64: 32, 16>}, {pipeline_mode = #tpu.pipeline_mode<synchronous>, transform_indices = @transform_5, window_bounds = array<i64: 1, 16>}, {transform_indices = @transform_6, window_bounds = array<i64: 1, 8, 16>}, {transform_indices = @transform_7, window_bounds = array<i64: 1, 8, 16>}]} {
    %c0 = arith.constant 0 : index
    %c0_0 = arith.constant 0 : index
    %c0_1 = arith.constant 0 : index
    %0 = vector.load %arg2[%c0, %c0_0, %c0_1] : memref<1x8x32xbf16, #tpu.memory_space<vmem>>, vector<1x8x32xbf16>
    %1 = vector.shape_cast %0 : vector<1x8x32xbf16> to vector<8x32xbf16>
    %c0_2 = arith.constant 0 : index
    %c0_3 = arith.constant 0 : index
    %2 = vector.load %arg4[%c0_2, %c0_3] : memref<32x16xbf16, #tpu.memory_space<vmem>>, vector<32x16xbf16>
    %cst = arith.constant dense<0.000000e+00> : vector<8x16xf32>
    %3 = tpu.matmul %1, %2, %cst {dimension_numbers = #tpu.dot_dimension_numbers<[1], [0], [0], [1], [0, 0, 1, 1], [], []>} : vector<8x32xbf16>, vector<32x16xbf16>, vector<8x16xf32> -> vector<8x16xf32>
    %c0_4 = arith.constant 0 : index
    %c0_5 = arith.constant 0 : index
    %4 = vector.load %arg5[%c0_4, %c0_5] : memref<1x16xf32, #tpu.memory_space<vmem>>, vector<1x16xf32>
    %5 = vector.broadcast %4 : vector<1x16xf32> to vector<8x16xf32>
    %6 = arith.addf %3, %5 : vector<8x16xf32>
    %7 = arith.truncf %6 : vector<8x16xf32> to vector<8x16xbf16>
    %c0_6 = arith.constant 0 : index
    %c0_7 = arith.constant 0 : index
    %c0_8 = arith.constant 0 : index
    %8 = vector.load %arg8[%c0_6, %c0_7, %c0_8] : memref<1x8x16xbf16, #tpu.memory_space<vmem>>, vector<1x8x16xbf16>
    %9 = vector.shape_cast %8 : vector<1x8x16xbf16> to vector<8x16xbf16>
    %10 = vector.shape_cast %7 : vector<8x16xbf16> to vector<1x8x16xbf16>
    tpu.vector_store %arg8[%c0_6, %c0_7, %c0_8], %10 {strides = array<i32>} : memref<1x8x16xbf16, #tpu.memory_space<vmem>>, vector<1x8x16xbf16>,
    %c0_9 = arith.constant 0 : index
    %c0_10 = arith.constant 0 : index
    %c0_11 = arith.constant 0 : index
    %11 = vector.load %arg3[%c0_9, %c0_10, %c0_11] : memref<1x8x32xbf16, #tpu.memory_space<vmem>>, vector<1x8x32xbf16>
    %12 = vector.shape_cast %11 : vector<1x8x32xbf16> to vector<8x32xbf16>
    %c0_12 = arith.constant 0 : index
    %c0_13 = arith.constant 0 : index
    %13 = vector.load %arg6[%c0_12, %c0_13] : memref<32x16xbf16, #tpu.memory_space<vmem>>, vector<32x16xbf16>
    %cst_14 = arith.constant dense<0.000000e+00> : vector<8x16xf32>
    %14 = tpu.matmul %12, %13, %cst_14 {dimension_numbers = #tpu.dot_dimension_numbers<[1], [0], [0], [1], [0, 0, 1, 1], [], []>} : vector<8x32xbf16>, vector<32x16xbf16>, vector<8x16xf32> -> vector<8x16xf32>
    %c0_15 = arith.constant 0 : index
    %c0_16 = arith.constant 0 : index
    %15 = vector.load %arg7[%c0_15, %c0_16] : memref<1x16xf32, #tpu.memory_space<vmem>>, vector<1x16xf32>
    %16 = vector.broadcast %15 : vector<1x16xf32> to vector<8x16xf32>
    %17 = arith.addf %14, %16 : vector<8x16xf32>
    %18 = arith.truncf %17 : vector<8x16xf32> to vector<8x16xbf16>
    %c0_17 = arith.constant 0 : index
    %c0_18 = arith.constant 0 : index
    %c0_19 = arith.constant 0 : index
    %19 = vector.load %arg9[%c0_17, %c0_18, %c0_19] : memref<1x8x16xbf16, #tpu.memory_space<vmem>>, vector<1x8x16xbf16>
    %20 = vector.shape_cast %19 : vector<1x8x16xbf16> to vector<8x16xbf16>
    %21 = vector.shape_cast %18 : vector<8x16xbf16> to vector<1x8x16xbf16>
    tpu.vector_store %arg9[%c0_17, %c0_18, %c0_19], %21 {strides = array<i32>} : memref<1x8x16xbf16, #tpu.memory_space<vmem>>, vector<1x8x16xbf16>,
    return
  }
  func.func @transform_0(%arg0: i32, %arg1: i32) -> (i32, i32, i32) {
    %c0_i32 = arith.constant 0 : i32
    %c0_i32_0 = arith.constant 0 : i32
    return %arg0, %arg1, %c0_i32 : i32, i32, i32
  }
  func.func @transform_1(%arg0: i32, %arg1: i32) -> (i32, i32, i32) {
    %c0_i32 = arith.constant 0 : i32
    %c0_i32_0 = arith.constant 0 : i32
    return %arg0, %arg1, %c0_i32 : i32, i32, i32
  }
  func.func @transform_2(%arg0: i32, %arg1: i32) -> (i32, i32) {
    %c0_i32 = arith.constant 0 : i32
    %c0_i32_0 = arith.constant 0 : i32
    %c0_i32_1 = arith.constant 0 : i32
    return %c0_i32, %c0_i32_0 : i32, i32
  }
  func.func @transform_3(%arg0: i32, %arg1: i32) -> (i32, i32) {
    %c0_i32 = arith.constant 0 : i32
    %c0_i32_0 = arith.constant 0 : i32
    %c0_i32_1 = arith.constant 0 : i32
    return %c0_i32, %c0_i32_0 : i32, i32
  }
  func.func @transform_4(%arg0: i32, %arg1: i32) -> (i32, i32) {
    %c0_i32 = arith.constant 0 : i32
    %c0_i32_0 = arith.constant 0 : i32
    %c0_i32_1 = arith.constant 0 : i32
    return %c0_i32, %c0_i32_0 : i32, i32
  }
  func.func @transform_5(%arg0: i32, %arg1: i32) -> (i32, i32) {
    %c0_i32 = arith.constant 0 : i32
    %c0_i32_0 = arith.constant 0 : i32
    %c0_i32_1 = arith.constant 0 : i32
    return %c0_i32, %c0_i32_0 : i32, i32
  }
  func.func @transform_6(%arg0: i32, %arg1: i32) -> (i32, i32, i32) {
    %c0_i32 = arith.constant 0 : i32
    %c0_i32_0 = arith.constant 0 : i32
    return %arg0, %arg1, %c0_i32 : i32, i32, i32
  }
  func.func @transform_7(%arg0: i32, %arg1: i32) -> (i32, i32, i32) {
    %c0_i32 = arith.constant 0 : i32
    %c0_i32_0 = arith.constant 0 : i32
    return %arg0, %arg1, %c0_i32 : i32, i32, i32
  }
}

module attributes {stable_mosaic.version = 11 : i64} {
  func.func @_q_proj_kernel(%arg0: i32, %arg1: i32, %arg2: memref<1x8x32xbf16, #tpu.memory_space<vmem>>, %arg3: memref<32x16xbf16, #tpu.memory_space<vmem>>, %arg4: memref<1x16xf32, #tpu.memory_space<vmem>>, %arg5: memref<1x8x16xbf16, #tpu.memory_space<vmem>>) attributes {dimension_semantics = [#tpu.dimension_semantics<parallel>, #tpu.dimension_semantics<parallel>], iteration_bounds = array<i64: 2, 1>, scalar_prefetch = 0 : i64, scratch_operands = 0 : i64, tpu.core_type = #tpu.core_type<tc>, window_params = [{transform_indices = @transform_0, window_bounds = array<i64: 1, 8, 32>}, {pipeline_mode = #tpu.pipeline_mode<synchronous>, transform_indices = @transform_1, window_bounds = array<i64: 32, 16>}, {pipeline_mode = #tpu.pipeline_mode<synchronous>, transform_indices = @transform_2, window_bounds = array<i64: 1, 16>}, {transform_indices = @transform_3, window_bounds = array<i64: 1, 8, 16>}]} {
    %c0 = arith.constant 0 : index
    %c0_0 = arith.constant 0 : index
    %c0_1 = arith.constant 0 : index
    %0 = vector.load %arg2[%c0, %c0_0, %c0_1] : memref<1x8x32xbf16, #tpu.memory_space<vmem>>, vector<1x8x32xbf16>
    %1 = vector.shape_cast %0 : vector<1x8x32xbf16> to vector<8x32xbf16>
    %c0_2 = arith.constant 0 : index
    %c0_3 = arith.constant 0 : index
    %2 = vector.load %arg3[%c0_2, %c0_3] : memref<32x16xbf16, #tpu.memory_space<vmem>>, vector<32x16xbf16>
    %cst = arith.constant dense<0.000000e+00> : vector<8x16xf32>
    %3 = tpu.matmul %1, %2, %cst {dimension_numbers = #tpu.dot_dimension_numbers<[1], [0], [0], [1], [0, 0, 1, 1], [], []>} : vector<8x32xbf16>, vector<32x16xbf16>, vector<8x16xf32> -> vector<8x16xf32>
    %c0_4 = arith.constant 0 : index
    %c0_5 = arith.constant 0 : index
    %4 = vector.load %arg4[%c0_4, %c0_5] : memref<1x16xf32, #tpu.memory_space<vmem>>, vector<1x16xf32>
    %5 = vector.broadcast %4 : vector<1x16xf32> to vector<8x16xf32>
    %6 = arith.addf %3, %5 : vector<8x16xf32>
    %7 = arith.truncf %6 : vector<8x16xf32> to vector<8x16xbf16>
    %c0_6 = arith.constant 0 : index
    %c0_7 = arith.constant 0 : index
    %c0_8 = arith.constant 0 : index
    %8 = vector.load %arg5[%c0_6, %c0_7, %c0_8] : memref<1x8x16xbf16, #tpu.memory_space<vmem>>, vector<1x8x16xbf16>
    %9 = vector.shape_cast %8 : vector<1x8x16xbf16> to vector<8x16xbf16>
    %10 = vector.shape_cast %7 : vector<8x16xbf16> to vector<1x8x16xbf16>
    tpu.vector_store %arg5[%c0_6, %c0_7, %c0_8], %10 {strides = array<i32>} : memref<1x8x16xbf16, #tpu.memory_space<vmem>>, vector<1x8x16xbf16>,
    return
  }
  func.func @transform_0(%arg0: i32, %arg1: i32) -> (i32, i32, i32) {
    %c0_i32 = arith.constant 0 : i32
    %c0_i32_0 = arith.constant 0 : i32
    return %arg0, %arg1, %c0_i32 : i32, i32, i32
  }
  func.func @transform_1(%arg0: i32, %arg1: i32) -> (i32, i32) {
    %c0_i32 = arith.constant 0 : i32
    %c0_i32_0 = arith.constant 0 : i32
    %c0_i32_1 = arith.constant 0 : i32
    return %c0_i32, %c0_i32_0 : i32, i32
  }
  func.func @transform_2(%arg0: i32, %arg1: i32) -> (i32, i32) {
    %c0_i32 = arith.constant 0 : i32
    %c0_i32_0 = arith.constant 0 : i32
    %c0_i32_1 = arith.constant 0 : i32
    return %c0_i32, %c0_i32_0 : i32, i32
  }
  func.func @transform_3(%arg0: i32, %arg1: i32) -> (i32, i32, i32) {
    %c0_i32 = arith.constant 0 : i32
    %c0_i32_0 = arith.constant 0 : i32
    return %arg0, %arg1, %c0_i32 : i32, i32, i32
  }
}

module attributes {stable_mosaic.version = 11 : i64} {
  func.func @_flash_kernel(%arg0: i32, %arg1: i32, %arg2: i32, %arg3: memref<1x8x16xbf16, #tpu.memory_space<vmem>>, %arg4: memref<1x8x16xbf16, #tpu.memory_space<vmem>>, %arg5: memref<1x8x16xbf16, #tpu.memory_space<vmem>>, %arg6: memref<1x8x16xf32, #tpu.memory_space<vmem>>, %arg7: memref<8x1xf32, #tpu.memory_space<vmem>>, %arg8: memref<8x1xf32, #tpu.memory_space<vmem>>, %arg9: memref<8x16xf32, #tpu.memory_space<vmem>>) attributes {dimension_semantics = [#tpu.dimension_semantics<parallel>, #tpu.dimension_semantics<parallel>, #tpu.dimension_semantics<arbitrary>], iteration_bounds = array<i64: 2, 1, 1>, scalar_prefetch = 0 : i64, scratch_operands = 3 : i64, tpu.core_type = #tpu.core_type<tc>, window_params = [{transform_indices = @transform_0, window_bounds = array<i64: 1, 8, 16>}, {transform_indices = @transform_1, window_bounds = array<i64: 1, 8, 16>}, {transform_indices = @transform_2, window_bounds = array<i64: 1, 8, 16>}, {transform_indices = @transform_3, window_bounds = array<i64: 1, 8, 16>}]} {
    %c0_i32 = arith.constant 0 : i32
    %0 = arith.cmpi eq, %arg2, %c0_i32 : i32
    %1 = arith.extui %0 : i1 to i32
    %c0_i32_0 = arith.constant 0 : i32
    %2 = arith.cmpi ne, %1, %c0_i32_0 : i32
    scf.if %2 {
      %cst_26 = arith.constant 0xFF800000 : f32
      %36 = vector.broadcast %cst_26 : f32 to vector<8x1xf32>
      %c0_27 = arith.constant 0 : index
      %c0_28 = arith.constant 0 : index
      %37 = vector.load %arg7[%c0_27, %c0_28] : memref<8x1xf32, #tpu.memory_space<vmem>>, vector<8x1xf32>
      tpu.vector_store %arg7[%c0_27, %c0_28], %36 {strides = array<i32>} : memref<8x1xf32, #tpu.memory_space<vmem>>, vector<8x1xf32>,
      %cst_29 = arith.constant 0.000000e+00 : f32
      %38 = vector.broadcast %cst_29 : f32 to vector<8x1xf32>
      %c0_30 = arith.constant 0 : index
      %c0_31 = arith.constant 0 : index
      %39 = vector.load %arg8[%c0_30, %c0_31] : memref<8x1xf32, #tpu.memory_space<vmem>>, vector<8x1xf32>
      tpu.vector_store %arg8[%c0_30, %c0_31], %38 {strides = array<i32>} : memref<8x1xf32, #tpu.memory_space<vmem>>, vector<8x1xf32>,
      %cst_32 = arith.constant 0.000000e+00 : f32
      %40 = vector.broadcast %cst_32 : f32 to vector<8x16xf32>
      %c0_33 = arith.constant 0 : index
      %c0_34 = arith.constant 0 : index
      %41 = vector.load %arg9[%c0_33, %c0_34] : memref<8x16xf32, #tpu.memory_space<vmem>>, vector<8x16xf32>
      tpu.vector_store %arg9[%c0_33, %c0_34], %40 {strides = array<i32>} : memref<8x16xf32, #tpu.memory_space<vmem>>, vector<8x16xf32>,
    } else {
    }
    %c0 = arith.constant 0 : index
    %c0_1 = arith.constant 0 : index
    %c0_2 = arith.constant 0 : index
    %3 = vector.load %arg3[%c0, %c0_1, %c0_2] : memref<1x8x16xbf16, #tpu.memory_space<vmem>>, vector<1x8x16xbf16>
    %4 = vector.shape_cast %3 : vector<1x8x16xbf16> to vector<8x16xbf16>
    %c0_3 = arith.constant 0 : index
    %c0_4 = arith.constant 0 : index
    %c0_5 = arith.constant 0 : index
    %5 = vector.load %arg4[%c0_3, %c0_4, %c0_5] : memref<1x8x16xbf16, #tpu.memory_space<vmem>>, vector<1x8x16xbf16>
    %6 = vector.shape_cast %5 : vector<1x8x16xbf16> to vector<8x16xbf16>
    %c0_6 = arith.constant 0 : index
    %c0_7 = arith.constant 0 : index
    %c0_8 = arith.constant 0 : index
    %7 = vector.load %arg5[%c0_6, %c0_7, %c0_8] : memref<1x8x16xbf16, #tpu.memory_space<vmem>>, vector<1x8x16xbf16>
    %8 = vector.shape_cast %7 : vector<1x8x16xbf16> to vector<8x16xbf16>
    %cst = arith.constant dense<0.000000e+00> : vector<8x8xf32>
    %9 = tpu.matmul %4, %6, %cst {dimension_numbers = #tpu.dot_dimension_numbers<[1], [1], [0], [0], [0, 0, 1, 0], [], []>} : vector<8x16xbf16>, vector<8x16xbf16>, vector<8x8xf32> -> vector<8x8xf32>
    %c0_9 = arith.constant 0 : index
    %c0_10 = arith.constant 0 : index
    %10 = vector.load %arg7[%c0_9, %c0_10] : memref<8x1xf32, #tpu.memory_space<vmem>>, vector<8x1xf32>
    %cst_11 = arith.constant dense<0xFF800000> : vector<8xf32>
    %11 = vector.multi_reduction <maximumf>, %9, %cst_11 [1] : vector<8x8xf32> to vector<8xf32>
    %12 = vector.shape_cast %11 : vector<8xf32> to vector<8x1xf32>
    %13 = arith.maximumf %10, %12 : vector<8x1xf32>
    %14 = arith.subf %10, %13 : vector<8x1xf32>
    %15 = math.exp %14 : vector<8x1xf32>
    %16 = vector.broadcast %13 : vector<8x1xf32> to vector<8x8xf32>
    %17 = arith.subf %9, %16 : vector<8x8xf32>
    %18 = math.exp %17 : vector<8x8xf32>
    %c0_12 = arith.constant 0 : index
    %c0_13 = arith.constant 0 : index
    %19 = vector.load %arg8[%c0_12, %c0_13] : memref<8x1xf32, #tpu.memory_space<vmem>>, vector<8x1xf32>
    %20 = arith.mulf %15, %19 : vector<8x1xf32>
    %cst_14 = arith.constant dense<0.000000e+00> : vector<8xf32>
    %21 = vector.multi_reduction <add>, %18, %cst_14 [1] : vector<8x8xf32> to vector<8xf32>
    %22 = vector.shape_cast %21 : vector<8xf32> to vector<8x1xf32>
    %23 = arith.addf %20, %22 : vector<8x1xf32>
    %c0_15 = arith.constant 0 : index
    %c0_16 = arith.constant 0 : index
    %24 = vector.load %arg8[%c0_15, %c0_16] : memref<8x1xf32, #tpu.memory_space<vmem>>, vector<8x1xf32>
    tpu.vector_store %arg8[%c0_15, %c0_16], %23 {strides = array<i32>} : memref<8x1xf32, #tpu.memory_space<vmem>>, vector<8x1xf32>,
    %c0_17 = arith.constant 0 : index
    %c0_18 = arith.constant 0 : index
    %25 = vector.load %arg9[%c0_17, %c0_18] : memref<8x16xf32, #tpu.memory_space<vmem>>, vector<8x16xf32>
    %26 = vector.broadcast %15 : vector<8x1xf32> to vector<8x16xf32>
    %27 = arith.mulf %26, %25 : vector<8x16xf32>
    %28 = arith.truncf %18 : vector<8x8xf32> to vector<8x8xbf16>
    %cst_19 = arith.constant dense<0.000000e+00> : vector<8x16xf32>
    %29 = tpu.matmul %28, %8, %cst_19 {dimension_numbers = #tpu.dot_dimension_numbers<[1], [0], [0], [1], [0, 0, 1, 1], [], []>} : vector<8x8xbf16>, vector<8x16xbf16>, vector<8x16xf32> -> vector<8x16xf32>
    %30 = arith.addf %27, %29 : vector<8x16xf32>
    %c0_20 = arith.constant 0 : index
    %c0_21 = arith.constant 0 : index
    %31 = vector.load %arg9[%c0_20, %c0_21] : memref<8x16xf32, #tpu.memory_space<vmem>>, vector<8x16xf32>
    tpu.vector_store %arg9[%c0_20, %c0_21], %30 {strides = array<i32>} : memref<8x16xf32, #tpu.memory_space<vmem>>, vector<8x16xf32>,
    %c0_22 = arith.constant 0 : index
    %c0_23 = arith.constant 0 : index
    %32 = vector.load %arg7[%c0_22, %c0_23] : memref<8x1xf32, #tpu.memory_space<vmem>>, vector<8x1xf32>
    tpu.vector_store %arg7[%c0_22, %c0_23], %13 {strides = array<i32>} : memref<8x1xf32, #tpu.memory_space<vmem>>, vector<8x1xf32>,
    %c0_i32_24 = arith.constant 0 : i32
    %33 = arith.cmpi eq, %arg2, %c0_i32_24 : i32
    %34 = arith.extui %33 : i1 to i32
    %c0_i32_25 = arith.constant 0 : i32
    %35 = arith.cmpi ne, %34, %c0_i32_25 : i32
    scf.if %35 {
      %c0_26 = arith.constant 0 : index
      %c0_27 = arith.constant 0 : index
      %36 = vector.load %arg8[%c0_26, %c0_27] : memref<8x1xf32, #tpu.memory_space<vmem>>, vector<8x1xf32>
      %37 = tpu.reciprocal %36 : vector<8x1xf32> -> vector<8x1xf32>
      %c0_28 = arith.constant 0 : index
      %c0_29 = arith.constant 0 : index
      %38 = vector.load %arg9[%c0_28, %c0_29] : memref<8x16xf32, #tpu.memory_space<vmem>>, vector<8x16xf32>
      %39 = vector.broadcast %37 : vector<8x1xf32> to vector<8x16xf32>
      %40 = arith.mulf %38, %39 : vector<8x16xf32>
      %c0_30 = arith.constant 0 : index
      %c0_31 = arith.constant 0 : index
      %c0_32 = arith.constant 0 : index
      %41 = vector.load %arg6[%c0_30, %c0_31, %c0_32] : memref<1x8x16xf32, #tpu.memory_space<vmem>>, vector<1x8x16xf32>
      %42 = vector.shape_cast %41 : vector<1x8x16xf32> to vector<8x16xf32>
      %43 = vector.shape_cast %40 : vector<8x16xf32> to vector<1x8x16xf32>
      tpu.vector_store %arg6[%c0_30, %c0_31, %c0_32], %43 {strides = array<i32>} : memref<1x8x16xf32, #tpu.memory_space<vmem>>, vector<1x8x16xf32>,
    } else {
    }
    return
  }
  func.func @transform_0(%arg0: i32, %arg1: i32, %arg2: i32) -> (i32, i32, i32) {
    %c0_i32 = arith.constant 0 : i32
    %c0_i32_0 = arith.constant 0 : i32
    return %arg0, %arg1, %c0_i32 : i32, i32, i32
  }
  func.func @transform_1(%arg0: i32, %arg1: i32, %arg2: i32) -> (i32, i32, i32) {
    %c0_i32 = arith.constant 0 : i32
    %c0_i32_0 = arith.constant 0 : i32
    return %arg0, %arg2, %c0_i32 : i32, i32, i32
  }
  func.func @transform_2(%arg0: i32, %arg1: i32, %arg2: i32) -> (i32, i32, i32) {
    %c0_i32 = arith.constant 0 : i32
    %c0_i32_0 = arith.constant 0 : i32
    return %arg0, %arg2, %c0_i32 : i32, i32, i32
  }
  func.func @transform_3(%arg0: i32, %arg1: i32, %arg2: i32) -> (i32, i32, i32) {
    %c0_i32 = arith.constant 0 : i32
    %c0_i32_0 = arith.constant 0 : i32
    return %arg0, %arg1, %c0_i32 : i32, i32, i32
  }
}

</mosaic_0001>

<llo_original>
// kernel: attention_forward.4
$region0: #{attention_forward.4}
  #allocation0 [shape = 'u32[]', space=smem, size = 0x4, offset = 0x4, fixed_abs, tag = 'smem constant byte address 0x4 - core index']
  #allocation1 [shape = 'u32[144,128]{1,0:T(1,128)}', space=vmem, size = 0x12000, scoped, tag = 'internal scratch']
  %s0 = inlined_call_operand.vmem [shape: bf16[2,8,32], index: 0, kind: input, shape index: {}]
  %s1 = inlined_call_operand.vmem [shape: bf16[2,8,32], index: 1, kind: input, shape index: {}]
  %s2 = inlined_call_operand.vmem [shape: bf16[32,16], index: 2, kind: input, shape index: {}]
  %s3 = inlined_call_operand.vmem [shape: f32[1,16], index: 3, kind: input, shape index: {}]
  %s4 = inlined_call_operand.vmem [shape: bf16[32,16], index: 4, kind: input, shape index: {}]
  %s5 = inlined_call_operand.vmem [shape: f32[1,16], index: 5, kind: input, shape index: {}]
  %s6 = inlined_call_operand.vmem [shape: bf16[2,8,16], index: 6, kind: output, shape index: {0}]
  %s7 = inlined_call_operand.vmem [shape: bf16[2,8,16], index: 7, kind: output, shape index: {1}]
  %8 = xla_tuple %s6, %s7
  %s9 = sld [smem:[#allocation0]]
  $region65: #{attention_forward.4} parent=0
    _
  %s11 = ssub.s32 1, %s9
  %s12 = scalar_select 0, %s11, %s9
  loop: start=0, step=1, limit=4
  $region2: #{attention_forward.4} parent=0 // loop_pre_header
    _
  $region3: #{attention_forward.4} parent=0 // loop_header
    %s14 = sphi 0, %s18
    %p15 = scmp.ge.s32.totalorder %s14, 4
    %s21 = sphi 0, %s33
    %s22 = sphi 0, %s29
    %s23 = sphi 0, %s21
    %s24 = sphi 0, %s22
    %s25 = sphi 0, %s23
    %s26 = sphi 0, %s24
    %s38 = sphi 0, %s40
    %s41 = sphi 0, %s38
    %s42 = sphi 0, %s41
    %s58 = sphi 0, %s42
    %s66 = sphi 0, %s68
    %s69 = sphi 0, %s66
    %s70 = sphi 0, %s69
    %s86 = sphi 0, %s70
    %s90 = sphi 0, %s90
    %s92 = sphi 0, %s90
    %s93 = sphi 0, %s92
    %s107 = sphi 0, %s93
    %s111 = sphi 0, %s111
    %s113 = sphi 0, %s111
    %s114 = sphi 0, %s113
    %s128 = sphi 0, %s114
    %s132 = sphi 0, %s132
    %s134 = sphi 0, %s132
    %s135 = sphi 0, %s134
    %s149 = sphi 0, %s135
    %s153 = sphi 0, %s153
    %s155 = sphi 0, %s153
    %s156 = sphi 0, %s155
    %s170 = sphi 0, %s156
    %s178 = sphi 0, %s180
    %s181 = sphi 0, %s178
    %s182 = sphi 0, %s181
    %s198 = sphi 0, %s182
    %s206 = sphi 0, %s208
    %s209 = sphi 0, %s206
    %s210 = sphi 0, %s209
    %s226 = sphi 0, %s210
  $region4: #{attention_forward.4} parent=0 // loop_header_branch
    %17 = sbr.rel (%p15) target = $region8
  $region5: #{attention_forward.4} parent=0 // loop_body
    %s19 = ssub.s32 %s14, 1
    %s20 = ssub.s32 %s14, 2
    %s27 = sadd.s32 1, %s22
    %p28 = scmp.ge.s32.totalorder %s27, 1
    %s29 = scalar_select %p28, 0, %s27
    %s30 = sadd.s32 1, %s21
    %s31 = scalar_select %p28, %s30, %s21
    %p32 = scmp.ge.s32.totalorder %s31, 2
    %s33 = scalar_select %p32, 0, %s31
    %s34 = ssub.s32 %s21, %s33
    %s35 = ssub.s32 %s22, %s29
    %s36 = sor.u32 %s34, %s35
    %p37 = scmp.eq.s32.totalorder %s36, 0
    %s39 = sadd.s32 %s38, 1
    %s40 = scalar_select %p37, %s38, %s39
    %p43 = pneg %p37
    %p44 = scmp.eq.s32.totalorder %s14, 1
    %p45 = por %p43, %p44
    %p46 = scmp.ne.s32.totalorder %s38, %s41
    %p47 = scmp.eq.s32.totalorder %s14, 0
    %p48 = por %p46, %p47
    %p49 = scmp.ne.s32.totalorder %s38, %s41
    %p50 = scmp.eq.s32.totalorder %s19, 1
    %p51 = por %p49, %p50
    %p52 = scmp.ne.s32.totalorder %s41, %s42
    %p53 = scmp.eq.s32.totalorder %s19, 0
    %p54 = por %p52, %p53
    %p55 = scmp.ne.s32.totalorder %s41, %s42
    %p56 = scmp.eq.s32.totalorder %s20, 1
    %p57 = por %p55, %p56
    %p59 = scmp.ne.s32.totalorder %s42, %s58
    %p60 = scmp.eq.s32.totalorder %s20, 0
    %p61 = por %p59, %p60
    %s62 = ssub.s32 %s21, %s33
    %s63 = ssub.s32 %s22, %s29
    %s64 = sor.u32 %s62, %s63
    %p65 = scmp.eq.s32.totalorder %s64, 0
    %s67 = sadd.s32 %s66, 1
    %s68 = scalar_select %p65, %s66, %s67
    %p71 = pneg %p65
    %p72 = scmp.eq.s32.totalorder %s14, 1
    %p73 = por %p71, %p72
    %p74 = scmp.ne.s32.totalorder %s66, %s69
    %p75 = scmp.eq.s32.totalorder %s14, 0
    %p76 = por %p74, %p75
    %p77 = scmp.ne.s32.totalorder %s66, %s69
    %p78 = scmp.eq.s32.totalorder %s19, 1
    %p79 = por %p77, %p78
    %p80 = scmp.ne.s32.totalorder %s69, %s70
    %p81 = scmp.eq.s32.totalorder %s19, 0
    %p82 = por %p80, %p81
    %p83 = scmp.ne.s32.totalorder %s69, %s70
    %p84 = scmp.eq.s32.totalorder %s20, 1
    %p85 = por %p83, %p84
    %p87 = scmp.ne.s32.totalorder %s70, %s86
    %p88 = scmp.eq.s32.totalorder %s20, 0
    %p89 = por %p87, %p88
    %s91 = sadd.s32 %s90, 1
    %p94 = scmp.eq.s32.totalorder %s14, 1
    %p95 = scmp.ne.s32.totalorder %s90, %s92
    %p96 = scmp.eq.s32.totalorder %s14, 0
    %p97 = por %p95, %p96
    %p98 = scmp.ne.s32.totalorder %s90, %s92
    %p99 = scmp.eq.s32.totalorder %s19, 1
    %p100 = por %p98, %p99
    %p101 = scmp.ne.s32.totalorder %s92, %s93
    %p102 = scmp.eq.s32.totalorder %s19, 0
    %p103 = por %p101, %p102
    %p104 = scmp.ne.s32.totalorder %s92, %s93
    %p105 = scmp.eq.s32.totalorder %s20, 1
    %p106 = por %p104, %p105
    %p108 = scmp.ne.s32.totalorder %s93, %s107
    %p109 = scmp.eq.s32.totalorder %s20, 0
    %p110 = por %p108, %p109
    %s112 = sadd.s32 %s111, 1
    %p115 = scmp.eq.s32.totalorder %s14, 1
    %p116 = scmp.ne.s32.totalorder %s111, %s113
    %p117 = scmp.eq.s32.totalorder %s14, 0
    %p118 = por %p116, %p117
    %p119 = scmp.ne.s32.totalorder %s111, %s113
    %p120 = scmp.eq.s32.totalorder %s19, 1
    %p121 = por %p119, %p120
    %p122 = scmp.ne.s32.totalorder %s113, %s114
    %p123 = scmp.eq.s32.totalorder %s19, 0
    %p124 = por %p122, %p123
    %p125 = scmp.ne.s32.totalorder %s113, %s114
    %p126 = scmp.eq.s32.totalorder %s20, 1
    %p127 = por %p125, %p126
    %p129 = scmp.ne.s32.totalorder %s114, %s128
    %p130 = scmp.eq.s32.totalorder %s20, 0
    %p131 = por %p129, %p130
    %s133 = sadd.s32 %s132, 1
    %p136 = scmp.eq.s32.totalorder %s14, 1
    %p137 = scmp.ne.s32.totalorder %s132, %s134
    %p138 = scmp.eq.s32.totalorder %s14, 0
    %p139 = por %p137, %p138
    %p140 = scmp.ne.s32.totalorder %s132, %s134
    %p141 = scmp.eq.s32.totalorder %s19, 1
    %p142 = por %p140, %p141
    %p143 = scmp.ne.s32.totalorder %s134, %s135
    %p144 = scmp.eq.s32.totalorder %s19, 0
    %p145 = por %p143, %p144
    %p146 = scmp.ne.s32.totalorder %s134, %s135
    %p147 = scmp.eq.s32.totalorder %s20, 1
    %p148 = por %p146, %p147
    %p150 = scmp.ne.s32.totalorder %s135, %s149
    %p151 = scmp.eq.s32.totalorder %s20, 0
    %p152 = por %p150, %p151
    %s154 = sadd.s32 %s153, 1
    %p157 = scmp.eq.s32.totalorder %s14, 1
    %p158 = scmp.ne.s32.totalorder %s153, %s155
    %p159 = scmp.eq.s32.totalorder %s14, 0
    %p160 = por %p158, %p159
    %p161 = scmp.ne.s32.totalorder %s153, %s155
    %p162 = scmp.eq.s32.totalorder %s19, 1
    %p163 = por %p161, %p162
    %p164 = scmp.ne.s32.totalorder %s155, %s156
    %p165 = scmp.eq.s32.totalorder %s19, 0
    %p166 = por %p164, %p165
    %p167 = scmp.ne.s32.totalorder %s155, %s156
    %p168 = scmp.eq.s32.totalorder %s20, 1
    %p169 = por %p167, %p168
    %p171 = scmp.ne.s32.totalorder %s156, %s170
    %p172 = scmp.eq.s32.totalorder %s20, 0
    %p173 = por %p171, %p172
    %s174 = ssub.s32 %s21, %s33
    %s175 = ssub.s32 %s22, %s29
    %s176 = sor.u32 %s174, %s175
    %p177 = scmp.eq.s32.totalorder %s176, 0
    %s179 = sadd.s32 %s178, 1
    %s180 = scalar_select %p177, %s178, %s179
    %p183 = pneg %p177
    %p184 = scmp.eq.s32.totalorder %s14, 1
    %p185 = por %p183, %p184
    %p186 = scmp.ne.s32.totalorder %s178, %s181
    %p187 = scmp.eq.s32.totalorder %s14, 0
    %p188 = por %p186, %p187
    %p189 = scmp.ne.s32.totalorder %s178, %s181
    %p190 = scmp.eq.s32.totalorder %s19, 1
    %p191 = por %p189, %p190
    %p192 = scmp.ne.s32.totalorder %s181, %s182
    %p193 = scmp.eq.s32.totalorder %s19, 0
    %p194 = por %p192, %p193
    %p195 = scmp.ne.s32.totalorder %s181, %s182
    %p196 = scmp.eq.s32.totalorder %s20, 1
    %p197 = por %p195, %p196
    %p199 = scmp.ne.s32.totalorder %s182, %s198
    %p200 = scmp.eq.s32.totalorder %s20, 0
    %p201 = por %p199, %p200
    %s202 = ssub.s32 %s21, %s33
    %s203 = ssub.s32 %s22, %s29
    %s204 = sor.u32 %s202, %s203
    %p205 = scmp.eq.s32.totalorder %s204, 0
    %s207 = sadd.s32 %s206, 1
    %s208 = scalar_select %p205, %s206, %s207
    %p211 = pneg %p205
    %p212 = scmp.eq.s32.totalorder %s14, 1
    %p213 = por %p211, %p212
    %p214 = scmp.ne.s32.totalorder %s206, %s209
    %p215 = scmp.eq.s32.totalorder %s14, 0
    %p216 = por %p214, %p215
    %p217 = scmp.ne.s32.totalorder %s206, %s209
    %p218 = scmp.eq.s32.totalorder %s19, 1
    %p219 = por %p217, %p218
    %p220 = scmp.ne.s32.totalorder %s209, %s210
    %p221 = scmp.eq.s32.totalorder %s19, 0
    %p222 = por %p220, %p221
    %p223 = scmp.ne.s32.totalorder %s209, %s210
    %p224 = scmp.eq.s32.totalorder %s20, 1
    %p225 = por %p223, %p224
    %p227 = scmp.ne.s32.totalorder %s210, %s226
    %p228 = scmp.eq.s32.totalorder %s20, 0
    %p229 = por %p227, %p228
    %p230 = scmp.le.s32.totalorder 1, %s14
    %p231 = scmp.lt.s32.totalorder %s14, 3
    %p232 = pnand %p230, %p231
    %p233 = pneg %p232
    // Predicated region
    $region9: #{attention_forward.4} parent=5 // pred_check
      _
    $region10: #{attention_forward.4} parent=5 // pred_check_branch
      %235 = sbr.rel (%p232) target = $region12
    $region11: #{attention_forward.4} parent=5 // pred_region
      %s236 = ssub.s32 %s14, 1
      // Predicated region
      $region13: #{attention_forward.4} parent=11 // pred_check
        %p237 = pneg %p103
      $region14: #{attention_forward.4} parent=11 // pred_check_branch
        %239 = sbr.rel (%p237) target = $region16
      $region15: #{attention_forward.4} parent=11 // pred_region
        _
      $region16: #{attention_forward.4} parent=11 // pred_fallthru
        _
      // Predicated region
      $region17: #{attention_forward.4} parent=11 // pred_check
        %p240 = pneg %p124
      $region18: #{attention_forward.4} parent=11 // pred_check_branch
        %242 = sbr.rel (%p240) target = $region20
      $region19: #{attention_forward.4} parent=11 // pred_region
        _
      $region20: #{attention_forward.4} parent=11 // pred_fallthru
        _
      // Predicated region
      $region21: #{attention_forward.4} parent=11 // pred_check
        %p243 = pneg %p145
      $region22: #{attention_forward.4} parent=11 // pred_check_branch
        %245 = sbr.rel (%p243) target = $region24
      $region23: #{attention_forward.4} parent=11 // pred_region
        _
      $region24: #{attention_forward.4} parent=11 // pred_fallthru
        _
      // Predicated region
      $region25: #{attention_forward.4} parent=11 // pred_check
        %p246 = pneg %p166
      $region26: #{attention_forward.4} parent=11 // pred_check_branch
        %248 = sbr.rel (%p246) target = $region28
      $region27: #{attention_forward.4} parent=11 // pred_region
        _
      $region28: #{attention_forward.4} parent=11 // pred_fallthru
        _
    $region12: #{attention_forward.4} parent=5 // pred_fallthru
      _
    %p249 = scmp.lt.s32.totalorder %s14, 2
    // Predicated region
    $region29: #{attention_forward.4} parent=5 // pred_check
      %p250 = pneg %p249
    $region30: #{attention_forward.4} parent=5 // pred_check_branch
      %252 = sbr.rel (%p250) target = $region32
    $region31: #{attention_forward.4} parent=5 // pred_region
      // Predicated region
      $region33: #{attention_forward.4} parent=31 // pred_check
        %p253 = pneg %p48
      $region34: #{attention_forward.4} parent=31 // pred_check_branch
        %255 = sbr.rel (%p253) target = $region36
      $region35: #{attention_forward.4} parent=31 // pred_region
        %p256 = scmp.lt.s32.totalorder %s21, 1
        %s257 = scalar_select %p256, %s21, 1
        %p258 = scmp.lt.s32.totalorder %s22, 0
        %s259 = scalar_select %p258, %s22, 0
        %s260 = sadd.s32 %s259, %s257
        %s261 = smul.addr %s260, 4
        %s262 = scalar_lea.vmem %s0, %s261
      $region36: #{attention_forward.4} parent=31 // pred_fallthru
        _
      // Predicated region
      $region37: #{attention_forward.4} parent=31 // pred_check
        %p263 = pneg %p76
      $region38: #{attention_forward.4} parent=31 // pred_check_branch
        %265 = sbr.rel (%p263) target = $region40
      $region39: #{attention_forward.4} parent=31 // pred_region
        %p266 = scmp.lt.s32.totalorder %s21, 1
        %s267 = scalar_select %p266, %s21, 1
        %p268 = scmp.lt.s32.totalorder %s22, 0
        %s269 = scalar_select %p268, %s22, 0
        %s270 = sadd.s32 %s269, %s267
        %s271 = smul.addr %s270, 4
        %s272 = scalar_lea.vmem %s1, %s271
      $region40: #{attention_forward.4} parent=31 // pred_fallthru
        _
    $region32: #{attention_forward.4} parent=5 // pred_fallthru
      _
    %p273 = scmp.le.s32.totalorder 1, %s14
    %p274 = scmp.lt.s32.totalorder %s14, 3
    %p275 = pnand %p273, %p274
    %p276 = pneg %p275
    // Predicated region
    $region41: #{attention_forward.4} parent=5 // pred_check
      _
    $region42: #{attention_forward.4} parent=5 // pred_check_branch
      %278 = sbr.rel (%p275) target = $region44
    $region43: #{attention_forward.4} parent=5 // pred_region
      %s279 = ssub.s32 %s14, 1
      %p280 = scmp.lt.s32.totalorder %s23, 1
      %s281 = scalar_select %p280, %s23, 1
      %p282 = scmp.lt.s32.totalorder %s24, 0
      %s283 = scalar_select %p282, %s24, 0
      %s284 = sadd.s32 %s283, %s281
      %s285 = smul.addr %s284, 4
      %s286 = scalar_lea.vmem %s0, %s285
      %p287 = pneg %p54
      %p288 = pneg %p51
      %p289 = scmp.lt.s32.totalorder %s23, 1
      %s290 = scalar_select %p289, %s23, 1
      %p291 = scmp.lt.s32.totalorder %s24, 0
      %s292 = scalar_select %p291, %s24, 0
      %s293 = sadd.s32 %s292, %s290
      %s294 = smul.addr %s293, 4
      %s295 = scalar_lea.vmem %s1, %s294
      %p296 = pneg %p82
      %p297 = pneg %p79
      %p298 = pneg %p103
      %p299 = pneg %p100
      %p300 = pneg %p124
      %p301 = pneg %p121
      %p302 = pneg %p145
      %p303 = pneg %p142
      %p304 = pneg %p166
      %p305 = pneg %p163
      %p306 = pneg %p194
      %p307 = pneg %p191
      %p308 = scmp.lt.s32.totalorder %s23, 1
      %s309 = scalar_select %p308, %s23, 1
      %p310 = scmp.lt.s32.totalorder %s24, 0
      %s311 = scalar_select %p310, %s24, 0
      %s312 = sadd.s32 %s311, %s309
      %s313 = smul.addr %s312, 4
      %s314 = scalar_lea.vmem %s6, %s313
      %p315 = pneg %p222
      %p316 = pneg %p219
      %p317 = scmp.lt.s32.totalorder %s23, 1
      %s318 = scalar_select %p317, %s23, 1
      %p319 = scmp.lt.s32.totalorder %s24, 0
      %s320 = scalar_select %p319, %s24, 0
      %s321 = sadd.s32 %s320, %s318
      %s322 = smul.addr %s321, 4
      %s323 = scalar_lea.vmem %s7, %s322
      %p324 = scmp.lt.s32.totalorder %s23, 1
      %s325 = scalar_select %p324, %s23, 1
      %p326 = scmp.lt.s32.totalorder %s24, 0
      %s327 = scalar_select %p326, %s24, 0
      %s328 = sadd.s32 %s327, %s325
      %s329 = smul.addr %s328, 4
      %s330 = scalar_lea.vmem %s0, %s329
      %p331 = scmp.lt.s32.totalorder %s23, 1
      %s332 = scalar_select %p331, %s23, 1
      %p333 = scmp.lt.s32.totalorder %s24, 0
      %s334 = scalar_select %p333, %s24, 0
      %s335 = sadd.s32 %s334, %s332
      %s336 = smul.addr %s335, 4
      %s337 = scalar_lea.vmem %s1, %s336
      %p338 = scmp.lt.s32.totalorder %s23, 1
      %s339 = scalar_select %p338, %s23, 1
      %p340 = scmp.lt.s32.totalorder %s24, 0
      %s341 = scalar_select %p340, %s24, 0
      %s342 = sadd.s32 %s341, %s339
      %s343 = smul.addr %s342, 4
      %s344 = scalar_lea.vmem %s6, %s343
      %p345 = scmp.lt.s32.totalorder %s23, 1
      %s346 = scalar_select %p345, %s23, 1
      %p347 = scmp.lt.s32.totalorder %s24, 0
      %s348 = scalar_select %p347, %s24, 0
      %s349 = sadd.s32 %s348, %s346
      %s350 = smul.addr %s349, 4
      %s351 = scalar_lea.vmem %s7, %s350
      %v353 = vld [vmem:[%s330] sm:$0xf]
      %v354 = vld [vmem:[%s2] sm:$0xf]
      %v355 = vld [vmem:[%s2 + $0x4] sm:$0xf]
      %v356 = vld [vmem:[%s2 + $0x8] sm:$0xf]
      %v357 = vld [vmem:[%s2 + $0xc] sm:$0xf]
      %v358 = vld [vmem:[%s3] sm:$0x1]
      %v360 = vlaneseq
      %v361 = vshrl.u32 %v360, 7
      %v362 = vsub.s32 0, %v361
      %v363 = vrot.slane %v358, %v362
      %v369 = vunpack.c.l.b16 %v354
      %v370 = vunpack.c.l.b16 %v355
      %v371 = vunpack.c.l.b16 %v356
      %v372 = vunpack.c.l.b16 %v357
      %v373 = vpack.c.b16 %v370, %v369
      %v374 = vpack.c.b16 %v372, %v371
      %vm377 = vcmask 261120
      %v379 = vsel %vm377, %v353, 0
      %381 = vmatprep.subr.bf16.mxu0 0
      %382 = vmatpush1.bf16.msra.mxu0 0
      %383 = vmatprep.subr.bf16.mxu0 0
      %384 = vmatpush1.bf16.msra.mxu0 0
      %385 = vmatprep.subr.bf16.mxu0 0
      %386 = vmatpush1.bf16.msra.mxu0 0
      %387 = vmatprep.subr.bf16.mxu0 0
      %388 = vmatpush1.bf16.msra.mxu0 0
      %389 = vmatprep.subr.bf16.mxu0 0
      %390 = vmatpush1.bf16.msra.mxu0 0
      %391 = vmatprep.subr.bf16.mxu0 0
      %392 = vmatpush1.bf16.msra.mxu0 0
      %393 = vmatprep.subr.bf16.mxu0 0
      %394 = vmatpush1.bf16.msra.mxu0 %v374
      %395 = vmatprep.subr.bf16.mxu0 0
      %396 = vmatpush1.bf16.msra.mxu0 %v373
      %397 = vmatprep.subr.bf16.mxu0 0
      %398 = vmatpush2.bf16.msra.mxu0 0
      %399 = vmatprep.subr.bf16.mxu0 0
      %400 = vmatpush2.bf16.msra.mxu0 0
      %401 = vmatprep.subr.bf16.mxu0 0
      %402 = vmatpush2.bf16.msra.mxu0 0
      %403 = vmatprep.subr.bf16.mxu0 0
      %404 = vmatpush2.bf16.msra.mxu0 0
      %405 = vmatprep.subr.bf16.mxu0 0
      %406 = vmatpush2.bf16.msra.mxu0 0
      %407 = vmatprep.subr.bf16.mxu0 0
      %408 = vmatpush2.bf16.msra.mxu0 0
      %409 = vmatprep.subr.bf16.mxu0 0
      %410 = vmatpush2.bf16.msra.mxu0 0
      %411 = vmatprep.subr.bf16.mxu0 0
      %412 = vmatpush2.bf16.msra.mxu0 0
      %413 = vmatprep.mubr.bf16.mxu0 0
      %414 = vmatmul.mubr.bf16.gmra.mxu0 %v379
      %v415 = vpop.f32.mrf.mxu0
      %v416 = vadd.f32 %v363, %v415
      %v417 = vpop.f32.mrf.mxu0
      %v418 = vpop.f32.mrf.mxu0
      %v419 = vpop.f32.mrf.mxu0
      %420 = vdwg.mxu0
      %v421 = vpack.c.bf16 %v416, %v416
      %vm422 = vcmask 125952
      %423 = vst.msk [vmem:[%s344] sm:$0xf] %vm422, %v421
      %v424 = vld [vmem:[%s337] sm:$0xf]
      %v425 = vld [vmem:[%s4] sm:$0xf]
      %v426 = vld [vmem:[%s4 + $0x4] sm:$0xf]
      %v427 = vld [vmem:[%s4 + $0x8] sm:$0xf]
      %v428 = vld [vmem:[%s4 + $0xc] sm:$0xf]
      %v429 = vld [vmem:[%s5] sm:$0x1]
      %v431 = vlaneseq
      %v432 = vshrl.u32 %v431, 7
      %v433 = vsub.s32 0, %v432
      %v434 = vrot.slane %v429, %v433
      %v440 = vunpack.c.l.b16 %v425
      %v441 = vunpack.c.l.b16 %v426
      %v442 = vunpack.c.l.b16 %v427
      %v443 = vunpack.c.l.b16 %v428
      %v444 = vpack.c.b16 %v441, %v440
      %v445 = vpack.c.b16 %v443, %v442
      %v449 = vsel %vm377, %v424, 0
      %451 = vmatprep.subr.bf16.mxu0 0
      %452 = vmatpush1.bf16.msra.mxu0 0
      %453 = vmatprep.subr.bf16.mxu0 0
      %454 = vmatpush1.bf16.msra.mxu0 0
      %455 = vmatprep.subr.bf16.mxu0 0
      %456 = vmatpush1.bf16.msra.mxu0 0
      %457 = vmatprep.subr.bf16.mxu0 0
      %458 = vmatpush1.bf16.msra.mxu0 0
      %459 = vmatprep.subr.bf16.mxu0 0
      %460 = vmatpush1.bf16.msra.mxu0 0
      %461 = vmatprep.subr.bf16.mxu0 0
      %462 = vmatpush1.bf16.msra.mxu0 0
      %463 = vmatprep.subr.bf16.mxu0 0
      %464 = vmatpush1.bf16.msra.mxu0 %v445
      %465 = vmatprep.subr.bf16.mxu0 0
      %466 = vmatpush1.bf16.msra.mxu0 %v444
      %467 = vmatprep.subr.bf16.mxu0 0
      %468 = vmatpush2.bf16.msra.mxu0 0
      %469 = vmatprep.subr.bf16.mxu0 0
      %470 = vmatpush2.bf16.msra.mxu0 0
      %471 = vmatprep.subr.bf16.mxu0 0
      %472 = vmatpush2.bf16.msra.mxu0 0
      %473 = vmatprep.subr.bf16.mxu0 0
      %474 = vmatpush2.bf16.msra.mxu0 0
      %475 = vmatprep.subr.bf16.mxu0 0
      %476 = vmatpush2.bf16.msra.mxu0 0
      %477 = vmatprep.subr.bf16.mxu0 0
      %478 = vmatpush2.bf16.msra.mxu0 0
      %479 = vmatprep.subr.bf16.mxu0 0
      %480 = vmatpush2.bf16.msra.mxu0 0
      %481 = vmatprep.subr.bf16.mxu0 0
      %482 = vmatpush2.bf16.msra.mxu0 0
      %483 = vmatprep.mubr.bf16.mxu0 0
      %484 = vmatmul.mubr.bf16.gmra.mxu0 %v449
      %v485 = vpop.f32.mrf.mxu0
      %v486 = vadd.f32 %v434, %v485
      %v487 = vpop.f32.mrf.mxu0
      %v488 = vpop.f32.mrf.mxu0
      %v489 = vpop.f32.mrf.mxu0
      %490 = vdwg.mxu0
      %v491 = vpack.c.bf16 %v486, %v486
      %492 = vst.msk [vmem:[%s351] sm:$0xf] %vm422, %v491
      %p493 = scmp.lt.s32.totalorder %s23, 1
      %s494 = scalar_select %p493, %s23, 1
      %p495 = scmp.lt.s32.totalorder %s24, 0
      %s496 = scalar_select %p495, %s24, 0
      %s497 = sadd.s32 %s496, %s494
      %s498 = smul.addr %s497, 4
      %s499 = scalar_lea.vmem %s6, %s498
      %p500 = scmp.lt.s32.totalorder %s23, 1
      %s501 = scalar_select %p500, %s23, 1
      %p502 = scmp.lt.s32.totalorder %s24, 0
      %s503 = scalar_select %p502, %s24, 0
      %s504 = sadd.s32 %s503, %s501
      %s505 = smul.addr %s504, 4
      %s506 = scalar_lea.vmem %s7, %s505
      // Predicated region
      $region45: #{attention_forward.4} parent=43 // pred_check
        %p507 = pneg %p191
      $region46: #{attention_forward.4} parent=43 // pred_check_branch
        %509 = sbr.rel (%p507) target = $region48
      $region47: #{attention_forward.4} parent=43 // pred_region
        _
      $region48: #{attention_forward.4} parent=43 // pred_fallthru
        _
      // Predicated region
      $region49: #{attention_forward.4} parent=43 // pred_check
        %p510 = pneg %p219
      $region50: #{attention_forward.4} parent=43 // pred_check_branch
        %512 = sbr.rel (%p510) target = $region52
      $region51: #{attention_forward.4} parent=43 // pred_region
        _
      $region52: #{attention_forward.4} parent=43 // pred_fallthru
        _
    $region44: #{attention_forward.4} parent=5 // pred_fallthru
      _
    %p513 = scmp.le.s32.totalorder 2, %s14
    // Predicated region
    $region53: #{attention_forward.4} parent=5 // pred_check
      %p514 = pneg %p513
    $region54: #{attention_forward.4} parent=5 // pred_check_branch
      %516 = sbr.rel (%p514) target = $region56
    $region55: #{attention_forward.4} parent=5 // pred_region
      %s517 = ssub.s32 %s14, 2
      // Predicated region
      $region57: #{attention_forward.4} parent=55 // pred_check
        %p518 = pneg %p197
      $region58: #{attention_forward.4} parent=55 // pred_check_branch
        %520 = sbr.rel (%p518) target = $region60
      $region59: #{attention_forward.4} parent=55 // pred_region
        %p521 = scmp.lt.s32.totalorder %s25, 1
        %s522 = scalar_select %p521, %s25, 1
        %p523 = scmp.lt.s32.totalorder %s26, 0
        %s524 = scalar_select %p523, %s26, 0
        %s525 = sadd.s32 %s524, %s522
        %s526 = smul.addr %s525, 4
        %s527 = scalar_lea.vmem %s6, %s526
      $region60: #{attention_forward.4} parent=55 // pred_fallthru
        _
      // Predicated region
      $region61: #{attention_forward.4} parent=55 // pred_check
        %p528 = pneg %p225
      $region62: #{attention_forward.4} parent=55 // pred_check_branch
        %530 = sbr.rel (%p528) target = $region64
      $region63: #{attention_forward.4} parent=55 // pred_region
        %p531 = scmp.lt.s32.totalorder %s25, 1
        %s532 = scalar_select %p531, %s25, 1
        %p533 = scmp.lt.s32.totalorder %s26, 0
        %s534 = scalar_select %p533, %s26, 0
        %s535 = sadd.s32 %s534, %s532
        %s536 = smul.addr %s535, 4
        %s537 = scalar_lea.vmem %s7, %s536
      $region64: #{attention_forward.4} parent=55 // pred_fallthru
        _
    $region56: #{attention_forward.4} parent=5 // pred_fallthru
      _
  $region6: #{attention_forward.4} parent=0 // loop_footer
    %s18 = sadd.s32 1, %s14
  $region7: #{attention_forward.4} parent=0 // loop_footer_branch
    %13 = sbr.rel target = $region3
  $region8: #{attention_forward.4} parent=0 // loop_exit
    _

// kernel: attention_forward.5
$region0: #{attention_forward.5}
  #allocation0 [shape = 'u32[]', space=smem, size = 0x4, offset = 0x4, fixed_abs, tag = 'smem constant byte address 0x4 - core index']
  #allocation1 [shape = 'u32[144,128]{1,0:T(1,128)}', space=vmem, size = 0x12000, scoped, tag = 'internal scratch']
  #allocation2 [shape = 'f32[8,1]{1,0:T(8,128)}', space=vmem, size = 0x1000, scoped, tag = 'scratch operand']
  #allocation3 [shape = 'f32[8,1]{1,0:T(8,128)}', space=vmem, size = 0x1000, scoped, tag = 'scratch operand']
  #allocation4 [shape = 'f32[8,16]{1,0:T(8,128)}', space=vmem, size = 0x1000, scoped, tag = 'scratch operand']
  %s0 = inlined_call_operand.vmem [shape: bf16[2,8,16], index: 0, kind: input, shape index: {}]
  %s1 = inlined_call_operand.vmem [shape: bf16[2,8,16], index: 1, kind: input, shape index: {}]
  %s2 = inlined_call_operand.vmem [shape: bf16[2,8,16], index: 2, kind: input, shape index: {}]
  %s3 = inlined_call_operand.hbm [shape: f32[2,8,16], index: 3, kind: output, shape index: {}]
  %s4 = sld [smem:[#allocation0]]
  $region53: #{attention_forward.5} parent=0
    _
  %s6 = ssub.s32 1, %s4
  %s7 = scalar_select 0, %s6, %s4
  $region1: #{attention_forward.5} parent=0
    #allocation5 [shape = 'u8[8192]{0}', space=vmem, size = 0x2000, scoped, tag = 'output window, operand 0']
    #allocation6 [shape = 's32[2]{0}', space=sflag, size = 0x8, scoped, tag = 'scoped memory for attention_forward.5']
    %8 = vsyncpa [#allocation6], 0
    %s9 = scalar_lea.sflag [#allocation6], 1
    %10 = vsyncpa %s9, 0
    loop: start=0, step=1, limit=4
    $region2: #{attention_forward.5} parent=1 // loop_pre_header
      _
    $region3: #{attention_forward.5} parent=1 // loop_header
      %s12 = sphi 0, %s16
      %p13 = scmp.ge.s32.totalorder %s12, 4
      %s19 = sphi 0, %s38
      %s20 = sphi 0, %s34
      %s21 = sphi 0, %s30
      %s22 = sphi 0, %s19
      %s23 = sphi 0, %s20
      %s24 = sphi 0, %s21
      %s25 = sphi 0, %s22
      %s26 = sphi 0, %s23
      %s27 = sphi 0, %s24
      %s43 = sphi 0, %s45
      %s46 = sphi 0, %s43
      %s47 = sphi 0, %s46
      %s63 = sphi 0, %s47
      %s71 = sphi 0, %s73
      %s74 = sphi 0, %s71
      %s75 = sphi 0, %s74
      %s91 = sphi 0, %s75
      %s99 = sphi 0, %s101
      %s102 = sphi 0, %s99
      %s103 = sphi 0, %s102
      %s119 = sphi 0, %s103
      %s127 = sphi 0, %s129
      %s130 = sphi 0, %s127
      %s131 = sphi 0, %s130
      %s147 = sphi 0, %s131
    $region4: #{attention_forward.5} parent=1 // loop_header_branch
      %15 = sbr.rel (%p13) target = $region8
    $region5: #{attention_forward.5} parent=1 // loop_body
      %s17 = ssub.s32 %s12, 1
      %s18 = ssub.s32 %s12, 2
      %s28 = sadd.s32 1, %s21
      %p29 = scmp.ge.s32.totalorder %s28, 1
      %s30 = scalar_select %p29, 0, %s28
      %s31 = sadd.s32 1, %s20
      %s32 = scalar_select %p29, %s31, %s20
      %p33 = scmp.ge.s32.totalorder %s32, 1
      %s34 = scalar_select %p33, 0, %s32
      %s35 = sadd.s32 1, %s19
      %s36 = scalar_select %p33, %s35, %s19
      %p37 = scmp.ge.s32.totalorder %s36, 2
      %s38 = scalar_select %p37, 0, %s36
      %s39 = ssub.s32 %s19, %s38
      %s40 = ssub.s32 %s20, %s34
      %s41 = sor.u32 %s39, %s40
      %p42 = scmp.eq.s32.totalorder %s41, 0
      %s44 = sadd.s32 %s43, 1
      %s45 = scalar_select %p42, %s43, %s44
      %p48 = pneg %p42
      %p49 = scmp.eq.s32.totalorder %s12, 1
      %p50 = por %p48, %p49
      %p51 = scmp.ne.s32.totalorder %s43, %s46
      %p52 = scmp.eq.s32.totalorder %s12, 0
      %p53 = por %p51, %p52
      %p54 = scmp.ne.s32.totalorder %s43, %s46
      %p55 = scmp.eq.s32.totalorder %s17, 1
      %p56 = por %p54, %p55
      %p57 = scmp.ne.s32.totalorder %s46, %s47
      %p58 = scmp.eq.s32.totalorder %s17, 0
      %p59 = por %p57, %p58
      %p60 = scmp.ne.s32.totalorder %s46, %s47
      %p61 = scmp.eq.s32.totalorder %s18, 1
      %p62 = por %p60, %p61
      %p64 = scmp.ne.s32.totalorder %s47, %s63
      %p65 = scmp.eq.s32.totalorder %s18, 0
      %p66 = por %p64, %p65
      %s67 = ssub.s32 %s19, %s38
      %s68 = ssub.s32 %s21, %s30
      %s69 = sor.u32 %s67, %s68
      %p70 = scmp.eq.s32.totalorder %s69, 0
      %s72 = sadd.s32 %s71, 1
      %s73 = scalar_select %p70, %s71, %s72
      %p76 = pneg %p70
      %p77 = scmp.eq.s32.totalorder %s12, 1
      %p78 = por %p76, %p77
      %p79 = scmp.ne.s32.totalorder %s71, %s74
      %p80 = scmp.eq.s32.totalorder %s12, 0
      %p81 = por %p79, %p80
      %p82 = scmp.ne.s32.totalorder %s71, %s74
      %p83 = scmp.eq.s32.totalorder %s17, 1
      %p84 = por %p82, %p83
      %p85 = scmp.ne.s32.totalorder %s74, %s75
      %p86 = scmp.eq.s32.totalorder %s17, 0
      %p87 = por %p85, %p86
      %p88 = scmp.ne.s32.totalorder %s74, %s75
      %p89 = scmp.eq.s32.totalorder %s18, 1
      %p90 = por %p88, %p89
      %p92 = scmp.ne.s32.totalorder %s75, %s91
      %p93 = scmp.eq.s32.totalorder %s18, 0
      %p94 = por %p92, %p93
      %s95 = ssub.s32 %s19, %s38
      %s96 = ssub.s32 %s21, %s30
      %s97 = sor.u32 %s95, %s96
      %p98 = scmp.eq.s32.totalorder %s97, 0
      %s100 = sadd.s32 %s99, 1
      %s101 = scalar_select %p98, %s99, %s100
      %p104 = pneg %p98
      %p105 = scmp.eq.s32.totalorder %s12, 1
      %p106 = por %p104, %p105
      %p107 = scmp.ne.s32.totalorder %s99, %s102
      %p108 = scmp.eq.s32.totalorder %s12, 0
      %p109 = por %p107, %p108
      %p110 = scmp.ne.s32.totalorder %s99, %s102
      %p111 = scmp.eq.s32.totalorder %s17, 1
      %p112 = por %p110, %p111
      %p113 = scmp.ne.s32.totalorder %s102, %s103
      %p114 = scmp.eq.s32.totalorder %s17, 0
      %p115 = por %p113, %p114
      %p116 = scmp.ne.s32.totalorder %s102, %s103
      %p117 = scmp.eq.s32.totalorder %s18, 1
      %p118 = por %p116, %p117
      %p120 = scmp.ne.s32.totalorder %s103, %s119
      %p121 = scmp.eq.s32.totalorder %s18, 0
      %p122 = por %p120, %p121
      %s123 = ssub.s32 %s19, %s38
      %s124 = ssub.s32 %s20, %s34
      %s125 = sor.u32 %s123, %s124
      %p126 = scmp.eq.s32.totalorder %s125, 0
      %s128 = sadd.s32 %s127, 1
      %s129 = scalar_select %p126, %s127, %s128
      %p132 = pneg %p126
      %p133 = scmp.eq.s32.totalorder %s12, 1
      %p134 = por %p132, %p133
      %p135 = scmp.ne.s32.totalorder %s127, %s130
      %p136 = scmp.eq.s32.totalorder %s12, 0
      %p137 = por %p135, %p136
      %p138 = scmp.ne.s32.totalorder %s127, %s130
      %p139 = scmp.eq.s32.totalorder %s17, 1
      %p140 = por %p138, %p139
      %p141 = scmp.ne.s32.totalorder %s130, %s131
      %p142 = scmp.eq.s32.totalorder %s17, 0
      %p143 = por %p141, %p142
      %p144 = scmp.ne.s32.totalorder %s130, %s131
      %p145 = scmp.eq.s32.totalorder %s18, 1
      %p146 = por %p144, %p145
      %p148 = scmp.ne.s32.totalorder %s131, %s147
      %p149 = scmp.eq.s32.totalorder %s18, 0
      %p150 = por %p148, %p149
      %p151 = scmp.le.s32.totalorder 1, %s12
      %p152 = scmp.lt.s32.totalorder %s12, 3
      %p153 = pnand %p151, %p152
      %p154 = pneg %p153
      // Predicated region
      $region9: #{attention_forward.5} parent=5 // pred_check
        _
      $region10: #{attention_forward.5} parent=5 // pred_check_branch
        %156 = sbr.rel (%p153) target = $region12
      $region11: #{attention_forward.5} parent=5 // pred_region
        %s157 = ssub.s32 %s12, 1
      $region12: #{attention_forward.5} parent=5 // pred_fallthru
        _
      %p158 = scmp.lt.s32.totalorder %s12, 2
      // Predicated region
      $region13: #{attention_forward.5} parent=5 // pred_check
        %p159 = pneg %p158
      $region14: #{attention_forward.5} parent=5 // pred_check_branch
        %161 = sbr.rel (%p159) target = $region16
      $region15: #{attention_forward.5} parent=5 // pred_region
        // Predicated region
        $region17: #{attention_forward.5} parent=15 // pred_check
          %p162 = pneg %p53
        $region18: #{attention_forward.5} parent=15 // pred_check_branch
          %164 = sbr.rel (%p162) target = $region20
        $region19: #{attention_forward.5} parent=15 // pred_region
          %p165 = scmp.lt.s32.totalorder %s19, 1
          %s166 = scalar_select %p165, %s19, 1
          %p167 = scmp.lt.s32.totalorder %s20, 0
          %s168 = scalar_select %p167, %s20, 0
          %s169 = sadd.s32 %s168, %s166
          %s170 = smul.addr %s169, 4
          %s171 = scalar_lea.vmem %s0, %s170
        $region20: #{attention_forward.5} parent=15 // pred_fallthru
          _
        // Predicated region
        $region21: #{attention_forward.5} parent=15 // pred_check
          %p172 = pneg %p81
        $region22: #{attention_forward.5} parent=15 // pred_check_branch
          %174 = sbr.rel (%p172) target = $region24
        $region23: #{attention_forward.5} parent=15 // pred_region
          %p175 = scmp.lt.s32.totalorder %s19, 1
          %s176 = scalar_select %p175, %s19, 1
          %p177 = scmp.lt.s32.totalorder %s21, 0
          %s178 = scalar_select %p177, %s21, 0
          %s179 = sadd.s32 %s178, %s176
          %s180 = smul.addr %s179, 4
          %s181 = scalar_lea.vmem %s1, %s180
        $region24: #{attention_forward.5} parent=15 // pred_fallthru
          _
        // Predicated region
        $region25: #{attention_forward.5} parent=15 // pred_check
          %p182 = pneg %p109
        $region26: #{attention_forward.5} parent=15 // pred_check_branch
          %184 = sbr.rel (%p182) target = $region28
        $region27: #{attention_forward.5} parent=15 // pred_region
          %p185 = scmp.lt.s32.totalorder %s19, 1
          %s186 = scalar_select %p185, %s19, 1
          %p187 = scmp.lt.s32.totalorder %s21, 0
          %s188 = scalar_select %p187, %s21, 0
          %s189 = sadd.s32 %s188, %s186
          %s190 = smul.addr %s189, 4
          %s191 = scalar_lea.vmem %s2, %s190
        $region28: #{attention_forward.5} parent=15 // pred_fallthru
          _
      $region16: #{attention_forward.5} parent=5 // pred_fallthru
        _
      %p192 = scmp.le.s32.totalorder 1, %s12
      %p193 = scmp.lt.s32.totalorder %s12, 3
      %p194 = pnand %p192, %p193
      %p195 = pneg %p194
      // Predicated region
      $region29: #{attention_forward.5} parent=5 // pred_check
        _
      $region30: #{attention_forward.5} parent=5 // pred_check_branch
        %197 = sbr.rel (%p194) target = $region32
      $region31: #{attention_forward.5} parent=5 // pred_region
        %s198 = ssub.s32 %s12, 1
        %p199 = scmp.lt.s32.totalorder %s22, 1
        %s200 = scalar_select %p199, %s22, 1
        %p201 = scmp.lt.s32.totalorder %s23, 0
        %s202 = scalar_select %p201, %s23, 0
        %s203 = sadd.s32 %s202, %s200
        %s204 = smul.addr %s203, 4
        %s205 = scalar_lea.vmem %s0, %s204
        %p206 = pneg %p59
        %p207 = pneg %p56
        %p208 = scmp.lt.s32.totalorder %s22, 1
        %s209 = scalar_select %p208, %s22, 1
        %p210 = scmp.lt.s32.totalorder %s24, 0
        %s211 = scalar_select %p210, %s24, 0
        %s212 = sadd.s32 %s211, %s209
        %s213 = smul.addr %s212, 4
        %s214 = scalar_lea.vmem %s1, %s213
        %p215 = pneg %p87
        %p216 = pneg %p84
        %p217 = scmp.lt.s32.totalorder %s22, 1
        %s218 = scalar_select %p217, %s22, 1
        %p219 = scmp.lt.s32.totalorder %s24, 0
        %s220 = scalar_select %p219, %s24, 0
        %s221 = sadd.s32 %s220, %s218
        %s222 = smul.addr %s221, 4
        %s223 = scalar_lea.vmem %s2, %s222
        %p224 = pneg %p115
        %p225 = pneg %p112
        %p226 = pneg %p143
        %p227 = pneg %p140
        %s228 = sand.u32 %s130, 1
        %s229 = scalar_lea.sflag [#allocation6], %s228
        %s230 = sand.u32 %s130, 1
        %s231 = smul.addr %s230, 8
        %s232 = scalar_lea.vmem [#allocation5], %s231
        %p233 = scmp.lt.s32.totalorder %s22, 1
        %s234 = scalar_select %p233, %s22, 1
        %p235 = scmp.lt.s32.totalorder %s23, 0
        %s236 = scalar_select %p235, %s23, 0
        %s237 = sadd.s32 %s236, %s234
        %s238 = smul.addr %s237, 4
        %s239 = scalar_lea.vmem %s0, %s238
        %p240 = scmp.lt.s32.totalorder %s22, 1
        %s241 = scalar_select %p240, %s22, 1
        %p242 = scmp.lt.s32.totalorder %s24, 0
        %s243 = scalar_select %p242, %s24, 0
        %s244 = sadd.s32 %s243, %s241
        %s245 = smul.addr %s244, 4
        %s246 = scalar_lea.vmem %s1, %s245
        %p247 = scmp.lt.s32.totalorder %s22, 1
        %s248 = scalar_select %p247, %s22, 1
        %p249 = scmp.lt.s32.totalorder %s24, 0
        %s250 = scalar_select %p249, %s24, 0
        %s251 = sadd.s32 %s250, %s248
        %s252 = smul.addr %s251, 4
        %s253 = scalar_lea.vmem %s2, %s252
        %p255 = scmp.eq.s32.totalorder %s24, 0
        // Predicated region
        $region33: #{attention_forward.5} parent=31 // pred_check
          %p256 = pneg %p255
        $region34: #{attention_forward.5} parent=31 // pred_check_branch
          %258 = sbr.rel (%p256) target = $region36
        $region35: #{attention_forward.5} parent=31 // pred_region
          %vm259 = vcmask 7168
          %260 = vst.msk [vmem:[#allocation2] sm:$0xff] %vm259, -inf
          %261 = vst.msk [vmem:[#allocation3] sm:$0xff] %vm259, 0.0
          %vm262 = vcmask 130048
          %263 = vst.msk [vmem:[#allocation4] sm:$0xff] %vm262, 0.0
        $region36: #{attention_forward.5} parent=31 // pred_fallthru
          _
        %v264 = vld [vmem:[%s239] sm:$0xf]
        %v265 = vld [vmem:[%s246] sm:$0xf]
        %v266 = vld [vmem:[%s253] sm:$0xf]
        %vm267 = vcmask 130048
        %v269 = vsel %vm267, %v264, 0
        %v272 = vsel %vm267, %v265, 0
        %274 = vmatprep.subr.bf16.mxu0 0
        %275 = vmatpush1.bf16.xpose.msra.mxu0 0
        %276 = vmatprep.subr.bf16.mxu0 0
        %277 = vmatpush1.bf16.xpose.msra.mxu0 0
        %278 = vmatprep.subr.bf16.mxu0 0
        %279 = vmatpush1.bf16.xpose.msra.mxu0 0
        %280 = vmatprep.subr.bf16.mxu0 0
        %281 = vmatpush1.bf16.xpose.msra.mxu0 0
        %282 = vmatprep.subr.bf16.mxu0 0
        %283 = vmatpush1.bf16.xpose.msra.mxu0 0
        %284 = vmatprep.subr.bf16.mxu0 0
        %285 = vmatpush1.bf16.xpose.msra.mxu0 0
        %286 = vmatprep.subr.bf16.mxu0 0
        %287 = vmatpush1.bf16.xpose.msra.mxu0 0
        %288 = vmatprep.subr.bf16.mxu0 0
        %289 = vmatpush1.bf16.xpose.msra.mxu0 %v272
        %290 = vmatprep.subr.bf16.mxu0 0
        %291 = vmatpush2.bf16.xpose.msra.mxu0 0
        %292 = vmatprep.subr.bf16.mxu0 0
        %293 = vmatpush2.bf16.xpose.msra.mxu0 0
        %294 = vmatprep.subr.bf16.mxu0 0
        %295 = vmatpush2.bf16.xpose.msra.mxu0 0
        %296 = vmatprep.subr.bf16.mxu0 0
        %297 = vmatpush2.bf16.xpose.msra.mxu0 0
        %298 = vmatprep.subr.bf16.mxu0 0
        %299 = vmatpush2.bf16.xpose.msra.mxu0 0
        %300 = vmatprep.subr.bf16.mxu0 0
        %301 = vmatpush2.bf16.xpose.msra.mxu0 0
        %302 = vmatprep.subr.bf16.mxu0 0
        %303 = vmatpush2.bf16.xpose.msra.mxu0 0
        %304 = vmatprep.subr.bf16.mxu0 0
        %305 = vmatpush2.bf16.xpose.msra.mxu0 0
        %306 = vmatprep.mubr.bf16.mxu0 0
        %307 = vmatmul.mubr.bf16.gmra.mxu0 %v269
        %v308 = vpop.f32.mrf.mxu0
        %v309 = vadd.f32 0.0, %v308
        %v310 = vpop.f32.mrf.mxu0
        %v311 = vpop.f32.mrf.mxu0
        %v312 = vpop.f32.mrf.mxu0
        %313 = vdwg.mxu0
        %v314 = vld [vmem:[#allocation2] sm:$0xff]
        %vm315 = vcmask 64512
        %v316 = vsel %vm315, %v309, -inf
        %317 = vmax.xlane.f32.xlu0 %v316
        %v318 = vpop.xlane.xlu0 %317
        %v319 = vmax.f32 %v314, %v318
        %v320 = vsub.f32 %v314, %v319
        %v321 = vmul.f32 %v320, 1.442695
        %v322 = vpow.pop %v321
        %324 = vset.pattern.permute.xlu0 0
        %325 = vperm.xlu0 %324, %v319
        %v326 = vpop.permute.xlu0 %325
        %v328 = vsub.f32 %v309, %v326
        %v329 = vmul.f32 %v328, 1.442695
        %v330 = vpow.pop %v329
        %v331 = vld [vmem:[#allocation3] sm:$0xff]
        %v332 = vmul.f32 %v322, %v331
        %v333 = vsel %vm315, %v330, 0.0
        %334 = vadd.xlane.f32.xlu0 %v333
        %v335 = vpop.xlane.xlu0 %334
        %v336 = vadd.f32 %v332, %v335
        %vm337 = vcmask 7168
        %338 = vst.msk [vmem:[#allocation3] sm:$0xff] %vm337, %v336
        %v339 = vld [vmem:[#allocation4] sm:$0xff]
        %341 = vset.pattern.permute.xlu0 0
        %342 = vperm.xlu0 %341, %v322
        %v343 = vpop.permute.xlu0 %342
        %v345 = vmul.f32 %v343, %v339
        %v346 = vpack.c.bf16 %v330, %v330
        %v348 = vsel %vm315, %v346, 0
        %vm350 = vcmask 1043456
        %v352 = vsel %vm350, %v266, 0
        %354 = vmatprep.subr.bf16.mxu0 0
        %355 = vmatpush1.bf16.msra.mxu0 0
        %356 = vmatprep.subr.bf16.mxu0 0
        %357 = vmatpush1.bf16.msra.mxu0 0
        %358 = vmatprep.subr.bf16.mxu0 0
        %359 = vmatpush1.bf16.msra.mxu0 0
        %360 = vmatprep.subr.bf16.mxu0 0
        %361 = vmatpush1.bf16.msra.mxu0 0
        %362 = vmatprep.subr.bf16.mxu0 0
        %363 = vmatpush1.bf16.msra.mxu0 0
        %364 = vmatprep.subr.bf16.mxu0 0
        %365 = vmatpush1.bf16.msra.mxu0 0
        %366 = vmatprep.subr.bf16.mxu0 0
        %367 = vmatpush1.bf16.msra.mxu0 0
        %368 = vmatprep.subr.bf16.mxu0 0
        %369 = vmatpush1.bf16.msra.mxu0 %v352
        %370 = vmatprep.subr.bf16.mxu0 0
        %371 = vmatpush2.bf16.msra.mxu0 0
        %372 = vmatprep.subr.bf16.mxu0 0
        %373 = vmatpush2.bf16.msra.mxu0 0
        %374 = vmatprep.subr.bf16.mxu0 0
        %375 = vmatpush2.bf16.msra.mxu0 0
        %376 = vmatprep.subr.bf16.mxu0 0
        %377 = vmatpush2.bf16.msra.mxu0 0
        %378 = vmatprep.subr.bf16.mxu0 0
        %379 = vmatpush2.bf16.msra.mxu0 0
        %380 = vmatprep.subr.bf16.mxu0 0
        %381 = vmatpush2.bf16.msra.mxu0 0
        %382 = vmatprep.subr.bf16.mxu0 0
        %383 = vmatpush2.bf16.msra.mxu0 0
        %384 = vmatprep.subr.bf16.mxu0 0
        %385 = vmatpush2.bf16.msra.mxu0 0
        %386 = vmatprep.mubr.bf16.mxu0 0
        %387 = vmatmul.mubr.bf16.gmra.mxu0 %v348
        %v388 = vpop.f32.mrf.mxu0
        %v389 = vadd.f32 0.0, %v388
        %v390 = vpop.f32.mrf.mxu0
        %v391 = vpop.f32.mrf.mxu0
        %v392 = vpop.f32.mrf.mxu0
        %393 = vdwg.mxu0
        %v394 = vadd.f32 %v345, %v389
        %395 = vst.msk [vmem:[#allocation4] sm:$0xff] %vm267, %v394
        %396 = vst.msk [vmem:[#allocation2] sm:$0xff] %vm337, %v319
        // Predicated region
        $region37: #{attention_forward.5} parent=31 // pred_check
          %p397 = pneg %p255
        $region38: #{attention_forward.5} parent=31 // pred_check_branch
          %399 = sbr.rel (%p397) target = $region40
        $region39: #{attention_forward.5} parent=31 // pred_region
          %v400 = vld [vmem:[#allocation3] sm:$0xff]
          %v401 = vrcp.pop %v400
          %v402 = vld [vmem:[#allocation4] sm:$0xff]
          %404 = vset.pattern.permute.xlu0 0
          %405 = vperm.xlu0 %404, %v401
          %v406 = vpop.permute.xlu0 %405
          %v408 = vmul.f32 %v402, %v406
          %409 = vst.msk [vmem:[%s232] sm:$0xff] %vm267, %v408
        $region40: #{attention_forward.5} parent=31 // pred_fallthru
          _
        %s410 = sand.u32 %s130, 1
        %s411 = scalar_lea.sflag [#allocation6], %s410
        %s412 = sand.u32 %s130, 1
        %s413 = smul.addr %s412, 8
        %s414 = scalar_lea.vmem [#allocation5], %s413
        // Predicated region
        $region41: #{attention_forward.5} parent=31 // pred_check
          %p415 = pneg %p140
        $region42: #{attention_forward.5} parent=31 // pred_check_branch
          %417 = sbr.rel (%p415) target = $region44
        $region43: #{attention_forward.5} parent=31 // pred_region
          %s419 = ssub.s32 128, 128
          %420 = vsyncadd %s411, %s419
          %s421 = sadd.s32 %s23, %s22
          %s422 = smul.addr %s421, 128
          %s423 = scalar_lea.hbm %s3, %s422
          %s425 = sshll.u32 %s414, 4
          %s426 = int_to_ptr.vmem [resolvable:$true] %s425
          %428 = dma.vmem_to_hbm [thread:$0]  %s426, 128, %s423, %s411
        $region44: #{attention_forward.5} parent=31 // pred_fallthru
          _
      $region32: #{attention_forward.5} parent=5 // pred_fallthru
        _
      %p429 = scmp.le.s32.totalorder 2, %s12
      // Predicated region
      $region45: #{attention_forward.5} parent=5 // pred_check
        %p430 = pneg %p429
      $region46: #{attention_forward.5} parent=5 // pred_check_branch
        %432 = sbr.rel (%p430) target = $region48
      $region47: #{attention_forward.5} parent=5 // pred_region
        %s433 = ssub.s32 %s12, 2
        // Predicated region
        $region49: #{attention_forward.5} parent=47 // pred_check
          %p434 = pneg %p146
        $region50: #{attention_forward.5} parent=47 // pred_check_branch
          %436 = sbr.rel (%p434) target = $region52
        $region51: #{attention_forward.5} parent=47 // pred_region
          %s437 = sand.u32 %s131, 1
          %s438 = scalar_lea.sflag [#allocation6], %s437
          %s439 = sand.u32 %s131, 1
          %s440 = smul.addr %s439, 8
          %s441 = scalar_lea.vmem [#allocation5], %s440
          %442 = dma.done %s438, 128
        $region52: #{attention_forward.5} parent=47 // pred_fallthru
          _
      $region48: #{attention_forward.5} parent=5 // pred_fallthru
        _
    $region6: #{attention_forward.5} parent=1 // loop_footer
      %s16 = sadd.s32 1, %s12
    $region7: #{attention_forward.5} parent=1 // loop_footer_branch
      %11 = sbr.rel target = $region3
    $region8: #{attention_forward.5} parent=1 // loop_exit
      _
    %443 = vsyncpa [#allocation6], 1
    %s444 = scalar_lea.sflag [#allocation6], 1
    %445 = vsyncpa %s444, 1

// kernel: attention_forward.3
$region0: #{attention_forward.3}
  #allocation0 [shape = 'u32[]', space=smem, size = 0x4, offset = 0x4, fixed_abs, tag = 'smem constant byte address 0x4 - core index']
  #allocation1 [shape = 'u32[144,128]{1,0:T(1,128)}', space=vmem, size = 0x12000, scoped, tag = 'internal scratch']
  %s0 = inlined_call_operand.vmem [shape: bf16[2,8,32], index: 0, kind: input, shape index: {}]
  %s1 = inlined_call_operand.vmem [shape: bf16[32,16], index: 1, kind: input, shape index: {}]
  %s2 = inlined_call_operand.vmem [shape: f32[1,16], index: 2, kind: input, shape index: {}]
  %s3 = inlined_call_operand.vmem [shape: bf16[2,8,16], index: 3, kind: output, shape index: {}]
  %s4 = sld [smem:[#allocation0]]
  $region45: #{attention_forward.3} parent=0
    _
  %s6 = ssub.s32 1, %s4
  %s7 = scalar_select 0, %s6, %s4
  loop: start=0, step=1, limit=4
  $region2: #{attention_forward.3} parent=0 // loop_pre_header
    _
  $region3: #{attention_forward.3} parent=0 // loop_header
    %s9 = sphi 0, %s13
    %p10 = scmp.ge.s32.totalorder %s9, 4
    %s16 = sphi 0, %s28
    %s17 = sphi 0, %s24
    %s18 = sphi 0, %s16
    %s19 = sphi 0, %s17
    %s20 = sphi 0, %s18
    %s21 = sphi 0, %s19
    %s33 = sphi 0, %s35
    %s36 = sphi 0, %s33
    %s37 = sphi 0, %s36
    %s53 = sphi 0, %s37
    %s57 = sphi 0, %s57
    %s59 = sphi 0, %s57
    %s60 = sphi 0, %s59
    %s74 = sphi 0, %s60
    %s78 = sphi 0, %s78
    %s80 = sphi 0, %s78
    %s81 = sphi 0, %s80
    %s95 = sphi 0, %s81
    %s103 = sphi 0, %s105
    %s106 = sphi 0, %s103
    %s107 = sphi 0, %s106
    %s123 = sphi 0, %s107
  $region4: #{attention_forward.3} parent=0 // loop_header_branch
    %12 = sbr.rel (%p10) target = $region8
  $region5: #{attention_forward.3} parent=0 // loop_body
    %s14 = ssub.s32 %s9, 1
    %s15 = ssub.s32 %s9, 2
    %s22 = sadd.s32 1, %s17
    %p23 = scmp.ge.s32.totalorder %s22, 1
    %s24 = scalar_select %p23, 0, %s22
    %s25 = sadd.s32 1, %s16
    %s26 = scalar_select %p23, %s25, %s16
    %p27 = scmp.ge.s32.totalorder %s26, 2
    %s28 = scalar_select %p27, 0, %s26
    %s29 = ssub.s32 %s16, %s28
    %s30 = ssub.s32 %s17, %s24
    %s31 = sor.u32 %s29, %s30
    %p32 = scmp.eq.s32.totalorder %s31, 0
    %s34 = sadd.s32 %s33, 1
    %s35 = scalar_select %p32, %s33, %s34
    %p38 = pneg %p32
    %p39 = scmp.eq.s32.totalorder %s9, 1
    %p40 = por %p38, %p39
    %p41 = scmp.ne.s32.totalorder %s33, %s36
    %p42 = scmp.eq.s32.totalorder %s9, 0
    %p43 = por %p41, %p42
    %p44 = scmp.ne.s32.totalorder %s33, %s36
    %p45 = scmp.eq.s32.totalorder %s14, 1
    %p46 = por %p44, %p45
    %p47 = scmp.ne.s32.totalorder %s36, %s37
    %p48 = scmp.eq.s32.totalorder %s14, 0
    %p49 = por %p47, %p48
    %p50 = scmp.ne.s32.totalorder %s36, %s37
    %p51 = scmp.eq.s32.totalorder %s15, 1
    %p52 = por %p50, %p51
    %p54 = scmp.ne.s32.totalorder %s37, %s53
    %p55 = scmp.eq.s32.totalorder %s15, 0
    %p56 = por %p54, %p55
    %s58 = sadd.s32 %s57, 1
    %p61 = scmp.eq.s32.totalorder %s9, 1
    %p62 = scmp.ne.s32.totalorder %s57, %s59
    %p63 = scmp.eq.s32.totalorder %s9, 0
    %p64 = por %p62, %p63
    %p65 = scmp.ne.s32.totalorder %s57, %s59
    %p66 = scmp.eq.s32.totalorder %s14, 1
    %p67 = por %p65, %p66
    %p68 = scmp.ne.s32.totalorder %s59, %s60
    %p69 = scmp.eq.s32.totalorder %s14, 0
    %p70 = por %p68, %p69
    %p71 = scmp.ne.s32.totalorder %s59, %s60
    %p72 = scmp.eq.s32.totalorder %s15, 1
    %p73 = por %p71, %p72
    %p75 = scmp.ne.s32.totalorder %s60, %s74
    %p76 = scmp.eq.s32.totalorder %s15, 0
    %p77 = por %p75, %p76
    %s79 = sadd.s32 %s78, 1
    %p82 = scmp.eq.s32.totalorder %s9, 1
    %p83 = scmp.ne.s32.totalorder %s78, %s80
    %p84 = scmp.eq.s32.totalorder %s9, 0
    %p85 = por %p83, %p84
    %p86 = scmp.ne.s32.totalorder %s78, %s80
    %p87 = scmp.eq.s32.totalorder %s14, 1
    %p88 = por %p86, %p87
    %p89 = scmp.ne.s32.totalorder %s80, %s81
    %p90 = scmp.eq.s32.totalorder %s14, 0
    %p91 = por %p89, %p90
    %p92 = scmp.ne.s32.totalorder %s80, %s81
    %p93 = scmp.eq.s32.totalorder %s15, 1
    %p94 = por %p92, %p93
    %p96 = scmp.ne.s32.totalorder %s81, %s95
    %p97 = scmp.eq.s32.totalorder %s15, 0
    %p98 = por %p96, %p97
    %s99 = ssub.s32 %s16, %s28
    %s100 = ssub.s32 %s17, %s24
    %s101 = sor.u32 %s99, %s100
    %p102 = scmp.eq.s32.totalorder %s101, 0
    %s104 = sadd.s32 %s103, 1
    %s105 = scalar_select %p102, %s103, %s104
    %p108 = pneg %p102
    %p109 = scmp.eq.s32.totalorder %s9, 1
    %p110 = por %p108, %p109
    %p111 = scmp.ne.s32.totalorder %s103, %s106
    %p112 = scmp.eq.s32.totalorder %s9, 0
    %p113 = por %p111, %p112
    %p114 = scmp.ne.s32.totalorder %s103, %s106
    %p115 = scmp.eq.s32.totalorder %s14, 1
    %p116 = por %p114, %p115
    %p117 = scmp.ne.s32.totalorder %s106, %s107
    %p118 = scmp.eq.s32.totalorder %s14, 0
    %p119 = por %p117, %p118
    %p120 = scmp.ne.s32.totalorder %s106, %s107
    %p121 = scmp.eq.s32.totalorder %s15, 1
    %p122 = por %p120, %p121
    %p124 = scmp.ne.s32.totalorder %s107, %s123
    %p125 = scmp.eq.s32.totalorder %s15, 0
    %p126 = por %p124, %p125
    %p127 = scmp.le.s32.totalorder 1, %s9
    %p128 = scmp.lt.s32.totalorder %s9, 3
    %p129 = pnand %p127, %p128
    %p130 = pneg %p129
    // Predicated region
    $region9: #{attention_forward.3} parent=5 // pred_check
      _
    $region10: #{attention_forward.3} parent=5 // pred_check_branch
      %132 = sbr.rel (%p129) target = $region12
    $region11: #{attention_forward.3} parent=5 // pred_region
      %s133 = ssub.s32 %s9, 1
      // Predicated region
      $region13: #{attention_forward.3} parent=11 // pred_check
        %p134 = pneg %p70
      $region14: #{attention_forward.3} parent=11 // pred_check_branch
        %136 = sbr.rel (%p134) target = $region16
      $region15: #{attention_forward.3} parent=11 // pred_region
        _
      $region16: #{attention_forward.3} parent=11 // pred_fallthru
        _
      // Predicated region
      $region17: #{attention_forward.3} parent=11 // pred_check
        %p137 = pneg %p91
      $region18: #{attention_forward.3} parent=11 // pred_check_branch
        %139 = sbr.rel (%p137) target = $region20
      $region19: #{attention_forward.3} parent=11 // pred_region
        _
      $region20: #{attention_forward.3} parent=11 // pred_fallthru
        _
    $region12: #{attention_forward.3} parent=5 // pred_fallthru
      _
    %p140 = scmp.lt.s32.totalorder %s9, 2
    // Predicated region
    $region21: #{attention_forward.3} parent=5 // pred_check
      %p141 = pneg %p140
    $region22: #{attention_forward.3} parent=5 // pred_check_branch
      %143 = sbr.rel (%p141) target = $region24
    $region23: #{attention_forward.3} parent=5 // pred_region
      // Predicated region
      $region25: #{attention_forward.3} parent=23 // pred_check
        %p144 = pneg %p43
      $region26: #{attention_forward.3} parent=23 // pred_check_branch
        %146 = sbr.rel (%p144) target = $region28
      $region27: #{attention_forward.3} parent=23 // pred_region
        %p147 = scmp.lt.s32.totalorder %s16, 1
        %s148 = scalar_select %p147, %s16, 1
        %p149 = scmp.lt.s32.totalorder %s17, 0
        %s150 = scalar_select %p149, %s17, 0
        %s151 = sadd.s32 %s150, %s148
        %s152 = smul.addr %s151, 4
        %s153 = scalar_lea.vmem %s0, %s152
      $region28: #{attention_forward.3} parent=23 // pred_fallthru
        _
    $region24: #{attention_forward.3} parent=5 // pred_fallthru
      _
    %p154 = scmp.le.s32.totalorder 1, %s9
    %p155 = scmp.lt.s32.totalorder %s9, 3
    %p156 = pnand %p154, %p155
    %p157 = pneg %p156
    // Predicated region
    $region29: #{attention_forward.3} parent=5 // pred_check
      _
    $region30: #{attention_forward.3} parent=5 // pred_check_branch
      %159 = sbr.rel (%p156) target = $region32
    $region31: #{attention_forward.3} parent=5 // pred_region
      %s160 = ssub.s32 %s9, 1
      %p161 = scmp.lt.s32.totalorder %s18, 1
      %s162 = scalar_select %p161, %s18, 1
      %p163 = scmp.lt.s32.totalorder %s19, 0
      %s164 = scalar_select %p163, %s19, 0
      %s165 = sadd.s32 %s164, %s162
      %s166 = smul.addr %s165, 4
      %s167 = scalar_lea.vmem %s0, %s166
      %p168 = pneg %p49
      %p169 = pneg %p46
      %p170 = pneg %p70
      %p171 = pneg %p67
      %p172 = pneg %p91
      %p173 = pneg %p88
      %p174 = pneg %p119
      %p175 = pneg %p116
      %p176 = scmp.lt.s32.totalorder %s18, 1
      %s177 = scalar_select %p176, %s18, 1
      %p178 = scmp.lt.s32.totalorder %s19, 0
      %s179 = scalar_select %p178, %s19, 0
      %s180 = sadd.s32 %s179, %s177
      %s181 = smul.addr %s180, 4
      %s182 = scalar_lea.vmem %s3, %s181
      %p183 = scmp.lt.s32.totalorder %s18, 1
      %s184 = scalar_select %p183, %s18, 1
      %p185 = scmp.lt.s32.totalorder %s19, 0
      %s186 = scalar_select %p185, %s19, 0
      %s187 = sadd.s32 %s186, %s184
      %s188 = smul.addr %s187, 4
      %s189 = scalar_lea.vmem %s0, %s188
      %p190 = scmp.lt.s32.totalorder %s18, 1
      %s191 = scalar_select %p190, %s18, 1
      %p192 = scmp.lt.s32.totalorder %s19, 0
      %s193 = scalar_select %p192, %s19, 0
      %s194 = sadd.s32 %s193, %s191
      %s195 = smul.addr %s194, 4
      %s196 = scalar_lea.vmem %s3, %s195
      %v198 = vld [vmem:[%s189] sm:$0xf]
      %v199 = vld [vmem:[%s1] sm:$0xf]
      %v200 = vld [vmem:[%s1 + $0x4] sm:$0xf]
      %v201 = vld [vmem:[%s1 + $0x8] sm:$0xf]
      %v202 = vld [vmem:[%s1 + $0xc] sm:$0xf]
      %v203 = vld [vmem:[%s2] sm:$0x1]
      %v205 = vlaneseq
      %v206 = vshrl.u32 %v205, 7
      %v207 = vsub.s32 0, %v206
      %v208 = vrot.slane %v203, %v207
      %v214 = vunpack.c.l.b16 %v199
      %v215 = vunpack.c.l.b16 %v200
      %v216 = vunpack.c.l.b16 %v201
      %v217 = vunpack.c.l.b16 %v202
      %v218 = vpack.c.b16 %v215, %v214
      %v219 = vpack.c.b16 %v217, %v216
      %vm222 = vcmask 261120
      %v224 = vsel %vm222, %v198, 0
      %226 = vmatprep.subr.bf16.mxu0 0
      %227 = vmatpush1.bf16.msra.mxu0 0
      %228 = vmatprep.subr.bf16.mxu0 0
      %229 = vmatpush1.bf16.msra.mxu0 0
      %230 = vmatprep.subr.bf16.mxu0 0
      %231 = vmatpush1.bf16.msra.mxu0 0
      %232 = vmatprep.subr.bf16.mxu0 0
      %233 = vmatpush1.bf16.msra.mxu0 0
      %234 = vmatprep.subr.bf16.mxu0 0
      %235 = vmatpush1.bf16.msra.mxu0 0
      %236 = vmatprep.subr.bf16.mxu0 0
      %237 = vmatpush1.bf16.msra.mxu0 0
      %238 = vmatprep.subr.bf16.mxu0 0
      %239 = vmatpush1.bf16.msra.mxu0 %v219
      %240 = vmatprep.subr.bf16.mxu0 0
      %241 = vmatpush1.bf16.msra.mxu0 %v218
      %242 = vmatprep.subr.bf16.mxu0 0
      %243 = vmatpush2.bf16.msra.mxu0 0
      %244 = vmatprep.subr.bf16.mxu0 0
      %245 = vmatpush2.bf16.msra.mxu0 0
      %246 = vmatprep.subr.bf16.mxu0 0
      %247 = vmatpush2.bf16.msra.mxu0 0
      %248 = vmatprep.subr.bf16.mxu0 0
      %249 = vmatpush2.bf16.msra.mxu0 0
      %250 = vmatprep.subr.bf16.mxu0 0
      %251 = vmatpush2.bf16.msra.mxu0 0
      %252 = vmatprep.subr.bf16.mxu0 0
      %253 = vmatpush2.bf16.msra.mxu0 0
      %254 = vmatprep.subr.bf16.mxu0 0
      %255 = vmatpush2.bf16.msra.mxu0 0
      %256 = vmatprep.subr.bf16.mxu0 0
      %257 = vmatpush2.bf16.msra.mxu0 0
      %258 = vmatprep.mubr.bf16.mxu0 0
      %259 = vmatmul.mubr.bf16.gmra.mxu0 %v224
      %v260 = vpop.f32.mrf.mxu0
      %v261 = vadd.f32 %v208, %v260
      %v262 = vpop.f32.mrf.mxu0
      %v263 = vpop.f32.mrf.mxu0
      %v264 = vpop.f32.mrf.mxu0
      %265 = vdwg.mxu0
      %v266 = vpack.c.bf16 %v261, %v261
      %vm267 = vcmask 125952
      %268 = vst.msk [vmem:[%s196] sm:$0xf] %vm267, %v266
      %p269 = scmp.lt.s32.totalorder %s18, 1
      %s270 = scalar_select %p269, %s18, 1
      %p271 = scmp.lt.s32.totalorder %s19, 0
      %s272 = scalar_select %p271, %s19, 0
      %s273 = sadd.s32 %s272, %s270
      %s274 = smul.addr %s273, 4
      %s275 = scalar_lea.vmem %s3, %s274
      // Predicated region
      $region33: #{attention_forward.3} parent=31 // pred_check
        %p276 = pneg %p116
      $region34: #{attention_forward.3} parent=31 // pred_check_branch
        %278 = sbr.rel (%p276) target = $region36
      $region35: #{attention_forward.3} parent=31 // pred_region
        _
      $region36: #{attention_forward.3} parent=31 // pred_fallthru
        _
    $region32: #{attention_forward.3} parent=5 // pred_fallthru
      _
    %p279 = scmp.le.s32.totalorder 2, %s9
    // Predicated region
    $region37: #{attention_forward.3} parent=5 // pred_check
      %p280 = pneg %p279
    $region38: #{attention_forward.3} parent=5 // pred_check_branch
      %282 = sbr.rel (%p280) target = $region40
    $region39: #{attention_forward.3} parent=5 // pred_region
      %s283 = ssub.s32 %s9, 2
      // Predicated region
      $region41: #{attention_forward.3} parent=39 // pred_check
        %p284 = pneg %p122
      $region42: #{attention_forward.3} parent=39 // pred_check_branch
        %286 = sbr.rel (%p284) target = $region44
      $region43: #{attention_forward.3} parent=39 // pred_region
        %p287 = scmp.lt.s32.totalorder %s20, 1
        %s288 = scalar_select %p287, %s20, 1
        %p289 = scmp.lt.s32.totalorder %s21, 0
        %s290 = scalar_select %p289, %s21, 0
        %s291 = sadd.s32 %s290, %s288
        %s292 = smul.addr %s291, 4
        %s293 = scalar_lea.vmem %s3, %s292
      $region44: #{attention_forward.3} parent=39 // pred_fallthru
        _
    $region40: #{attention_forward.3} parent=5 // pred_fallthru
      _
  $region6: #{attention_forward.3} parent=0 // loop_footer
    %s13 = sadd.s32 1, %s9
  $region7: #{attention_forward.3} parent=0 // loop_footer_branch
    %8 = sbr.rel target = $region3
  $region8: #{attention_forward.3} parent=0 // loop_exit
    _

</llo_original>
